<compile_context>
chip_gen: v7x
topology: tpu7x:2x2x1
jax: 0.10.0
libtpu: 0.0.40
codegen_flags: <defaults>
</compile_context>

<pallas_src>
from typing import NamedTuple

import jax
import jax.numpy as jnp
from jax import lax
from jax.experimental import pallas as pl
from jax.experimental.pallas import tpu as pltpu

BN_EPS = 1e-5
CPAD = 128  # channel / contraction axis padded to a full 128-lane vector
GUARD = 8   # zero guard rows around the deinterleaved layer-0 output halves


class _LayerCfg(NamedTuple):
    k: int
    stride: int
    pad: int
    t_in: int
    t_out: int
    silu: bool


def _round_up(x, m):
    return (x + m - 1) // m * m


def _tap_groups(k):
    """Pair taps along the contraction (K=256 groups) with a possible lone tail."""
    groups, j = [], 0
    while j < k:
        if j + 1 < k:
            groups.append((j, j + 1))
            j += 2
        else:
            groups.append((j,))
            j += 1
    return tuple(groups)


# ---------------------------------------------------------------------------
# Fused whole-network kernel (one grid step == one batch element)
# ---------------------------------------------------------------------------
def _make_kernel(cfgs, groups, tap1_rows, even_base, odd_base, buf0_rows):
    n_layers = len(cfgs)
    half_e = (cfgs[0].t_out + 1) // 2
    half_o = cfgs[0].t_out // 2

    def kernel(*refs):
        idx = 0
        x0_ref = refs[idx]; idx += 1            # (T0_out, CPAD) im2col'd input, rows [even|odd]
        w0_ref = refs[idx]; idx += 1            # (CPAD, CPAD) layer-0 im2col weight (BN folded)
        w_grps = []
        for l in range(1, n_layers):            # grouped per-tap weights, (len(grp)*CPAD, CPAD)
            ng = len(groups[l])
            w_grps.append(refs[idx:idx + ng]); idx += ng
        sh_ref = refs[idx]; idx += 1            # (8, CPAD) per-layer BN shifts
        o_ref = refs[idx]; idx += 1             # (T_last, CPAD) output (batch squeezed)
        bufs = refs[idx:]                       # VMEM scratch: input buffer per layer >= 1

        f32 = jnp.float32

        def bn_act(y, l):
            y = y + sh_ref[l:l + 1, :]          # BN shift (scale already folded into W)
            if cfgs[l].silu:
                # SiLU = y * sigmoid(y); approx reciprocal rides the EUP slot.
                y = y * pl.reciprocal(1.0 + jnp.exp(-y), approx=True)
            return y

        def conv_from_taps(read_tap, wrefs, grp, l):
            y = None
            for g, taps in enumerate(grp):
                a = read_tap(taps[0])
                if len(taps) == 2:              # pack 2 taps along K (256-deep contraction)
                    a = jnp.concatenate([a, read_tap(taps[1])], axis=-1)
                p = jnp.dot(a, wrefs[g][...], preferred_element_type=f32)
                y = p if y is None else y + p
            return bn_act(y, l)

        # ---- Layer 0: a single lane-packed im2col matmul.  Output rows are already
        #      ordered [even output positions | odd output positions].
        y = jnp.dot(x0_ref[...], w0_ref[...], preferred_element_type=f32)
        y = bn_act(y, 0)

        # ---- Stash layer-0 output deinterleaved (8-row aligned halves) into buf0.
        #      Only the small guard regions are zeroed, every step (megacore-safe).
        buf0 = bufs[0]
        buf0[0:even_base, :] = jnp.zeros((even_base, CPAD), f32)
        mid = odd_base - (even_base + half_e)
        buf0[even_base + half_e:odd_base, :] = jnp.zeros((mid, CPAD), f32)
        tail = buf0_rows - (odd_base + half_o)
        if tail > 0:
            buf0[odd_base + half_o:buf0_rows, :] = jnp.zeros((tail, CPAD), f32)
        buf0[even_base:even_base + half_e, :] = y[0:half_e, :]
        buf0[odd_base:odd_base + half_o, :] = y[half_e:half_e + half_o, :]

        # ---- Layer 1: contiguous tap slices from the deinterleaved buffer.
        t1 = cfgs[1].t_out

        def read_tap1(j):
            return buf0[pl.ds(tap1_rows[j], t1), :]

        y = conv_from_taps(read_tap1, w_grps[0], groups[1], 1)

        # ---- Layers >= 2: tiny (<=32 rows); per-tap strided gathers are negligible.
        for l in range(2, n_layers):
            src = bufs[l - 1]
            cfg = cfgs[l]
            src[0:cfg.t_in, :] = y              # stash previous activation (8-aligned base)

            def read_tap(j, src=src, t_out=cfg.t_out, s=cfg.stride):
                return src[pl.ds(j, t_out, stride=s), :]

            y = conv_from_taps(read_tap, w_grps[l - 1], groups[l], l)

        o_ref[...] = y

    return kernel


# ---------------------------------------------------------------------------
# Wrapper: layout / parameter packing glue around the single pallas_call
# ---------------------------------------------------------------------------
def feature_network_small_forward(x, params):
    """Pallas implementation of FeatureNetwork_small.forward (n_dim=1, eval-mode BN).

    x: (B, C_in, T) float32.
    params: list of (w, gamma, beta, mean, var, stride, pad, apply_silu),
            w has PyTorch Conv1d layout (C_out, C_in, k).
    Returns (B, C_last * T_last), channel-major flatten like nn.Flatten.
    """
    B, c0, t = x.shape
    n_layers = len(params)
    assert n_layers >= 2

    # ---- static per-layer geometry
    cfgs = []
    t_in = t
    for (w, gamma, beta, mean, var, stride, pad, silu) in params:
        c_out, c_in, k = w.shape
        assert c_out <= CPAD and c_in <= CPAD
        t_out = (t_in + 2 * pad - k) // stride + 1
        assert t_out >= 1, "input too short for this network"
        cfgs.append(_LayerCfg(k, stride, pad, t_in, t_out, silu))
        t_in = t_out
    cfgs = tuple(cfgs)

    # restrictions of this fused layout (all hold for FeatureNetwork_small)
    c_out0, c_in0, k0 = params[0][0].shape
    assert k0 * c_in0 <= CPAD, "layer-0 im2col must fit in 128 lanes"
    assert cfgs[0].t_out % 2 == 0, "even/odd split of layer-0 output"
    assert cfgs[1].stride == 2, "deinterleaved feed assumes stride-2 layer 1"
    for cfg in cfgs[2:]:
        assert cfg.pad == 0 and cfg.t_in >= cfg.k

    groups = (None,) + tuple(_tap_groups(cfgs[l].k) for l in range(1, n_layers))

    # ---- buf0 layout (feeds layer 1): [zeros | even half | zeros | odd half | zeros]
    half_e = (cfgs[0].t_out + 1) // 2
    half_o = cfgs[0].t_out // 2
    even_base = GUARD
    odd_base = even_base + _round_up(half_e, 8) + GUARD
    buf0_rows = odd_base + _round_up(half_o, 8) + GUARD

    # layer-1 tap j reads x0[2t + j - pad1]  ->  contiguous slice of one half
    t1 = cfgs[1].t_out
    tap1_rows = []
    for j in range(cfgs[1].k):
        d = j - cfgs[1].pad
        if d % 2 == 0:
            r = even_base + d // 2
            assert 0 <= r and r + t1 <= odd_base
        else:
            r = odd_base + (d - 1) // 2
            assert even_base + half_e <= r and r + t1 <= buf0_rows
        tap1_rows.append(r)
    tap1_rows = tuple(tap1_rows)

    # ---- layer-0 im2col on the wrapper side (tiny XLA glue):
    #      rows = output positions ordered [even | odd]; lanes = tap-major (j*C_in + c).
    cfg0 = cfgs[0]
    xt = jnp.transpose(x, (0, 2, 1)).astype(jnp.float32)                   # (B, T, C)
    xt = jnp.pad(xt, ((0, 0), (cfg0.pad, cfg0.pad + cfg0.k), (0, 0)))      # ample right pad
    taps = [xt[:, j:j + cfg0.stride * (cfg0.t_out - 1) + 1:cfg0.stride, :]
            for j in range(cfg0.k)]
    x0 = jnp.concatenate(taps, axis=-1)                                    # (B, T0_out, k*C_in)
    x0 = jnp.concatenate([x0[:, 0::2, :], x0[:, 1::2, :]], axis=1)         # [even | odd] rows
    x0 = jnp.pad(x0, ((0, 0), (0, 0), (0, CPAD - cfg0.k * c_in0)))

    # ---- pack weights with BN scale folded in; group taps in pairs along K.
    def fold(w, gamma, var):
        scale = gamma * lax.rsqrt(var + BN_EPS)
        return w * scale[:, None, None], scale

    shifts = jnp.zeros((_round_up(n_layers, 8), CPAD), jnp.float32)

    (w, gamma, beta, mean, var, _, _, _) = params[0]
    w_s, scale = fold(w, gamma, var)
    w0 = jnp.transpose(w_s, (2, 1, 0)).reshape(k0 * c_in0, c_out0)          # (k*C_in, C_out)
    w0 = jnp.pad(w0, ((0, CPAD - k0 * c_in0), (0, CPAD - c_out0))).astype(jnp.float32)
    shifts = shifts.at[0, :c_out0].set(beta - mean * scale)

    grp_weights = []                                                        # per layer >= 1
    for l in range(1, n_layers):
        (w, gamma, beta, mean, var, _, _, _) = params[l]
        c_out, c_in, k = w.shape
        w_s, scale = fold(w, gamma, var)
        shifts = shifts.at[l, :c_out].set(beta - mean * scale)
        per_tap = jnp.pad(jnp.transpose(w_s, (2, 1, 0)),                    # (k, C_in, C_out)
                          ((0, 0), (0, CPAD - c_in), (0, CPAD - c_out))).astype(jnp.float32)
        grp_weights.append([jnp.concatenate([per_tap[j] for j in taps], axis=0)
                            for taps in groups[l]])

    flat_w = [m for layer_list in grp_weights for m in layer_list]

    # ---- VMEM scratch: deinterleaved layer-1 feed + contiguous feeds for layers >= 2.
    scratch = [pltpu.VMEM((buf0_rows, CPAD), jnp.float32)]
    for l in range(2, n_layers):
        scratch.append(pltpu.VMEM((_round_up(cfgs[l].t_in, 8), CPAD), jnp.float32))

    t_last = cfgs[-1].t_out
    c_last = params[-1][0].shape[0]

    in_specs = (
        [pl.BlockSpec((None, cfg0.t_out, CPAD), lambda b: (b, 0, 0))]
        + [pl.BlockSpec(w0.shape, lambda b: (0, 0))]
        + [pl.BlockSpec(m.shape, lambda b: (0, 0)) for m in flat_w]
        + [pl.BlockSpec(shifts.shape, lambda b: (0, 0))]
    )

    out = pl.pallas_call(
        _make_kernel(cfgs, groups, tap1_rows, even_base, odd_base, buf0_rows),
        out_shape=jax.ShapeDtypeStruct((B, t_last, CPAD), jnp.float32),
        grid_spec=pltpu.PrefetchScalarGridSpec(
            num_scalar_prefetch=0,
            grid=(B,),
            in_specs=in_specs,
            out_specs=pl.BlockSpec((None, t_last, CPAD), lambda b: (b, 0, 0)),
            scratch_shapes=scratch,
        ),
        compiler_params=pltpu.CompilerParams(
            dimension_semantics=("parallel",)),
    )(x0, w0, *flat_w, shifts)

    # (B, T_last, CPAD) -> PyTorch Flatten order (B, C_last * T_last).
    out = out[:, :, :c_last]
    return jnp.transpose(out, (0, 2, 1)).reshape(B, c_last * t_last)


# ---------------------------------------------------------------------------
# Pure-JAX reference (for correctness check)
# ---------------------------------------------------------------------------
def _reference_forward(x, params):
    for (w, gamma, beta, mean, var, stride, pad, apply_silu) in params:
        y = lax.conv_general_dilated(
            x, w, window_strides=(stride,), padding=[(pad, pad)],
            dimension_numbers=("NCH", "OIH", "NCH"),
            precision=lax.Precision.HIGHEST,
        )
        scale = gamma / jnp.sqrt(var + BN_EPS)
        shift = beta - mean * scale
        y = y * scale[None, :, None] + shift[None, :, None]
        if apply_silu:
            y = y * jax.nn.sigmoid(y)
        x = y
    B, C, T = x.shape
    return x.reshape(B, C * T)


# ---------------------------------------------------------------------------
# Deterministic parameter construction (matches __init__ shapes, n_dim=1)
# ---------------------------------------------------------------------------
def make_params(key, input_channels):
    # (C_in, C_out, k, stride, pad, silu_after_bn)
    layer_cfg = [
        (input_channels, 32, 7, 2, 3, True),
        (32, 64, 5, 2, 2, True),
        (64, 128, 3, 2, 0, True),
        (128, 32, 3, 2, 0, True),
        (32, 16, 3, 2, 0, False),   # last block: conv + bn + Flatten (no SiLU)
    ]
    params = []
    for (c_in, c_out, k, s, p, silu) in layer_cfg:
        key, kw, kg, kb, km, kv = jax.random.split(key, 6)
        w = jax.random.normal(kw, (c_out, c_in, k), jnp.float32) / jnp.sqrt(c_in * k)
        gamma = 1.0 + 0.1 * jax.random.normal(kg, (c_out,), jnp.float32)
        beta = 0.1 * jax.random.normal(kb, (c_out,), jnp.float32)
        mean = 0.1 * jax.random.normal(km, (c_out,), jnp.float32)
        var = jax.random.uniform(kv, (c_out,), jnp.float32, minval=0.5, maxval=1.5)
        params.append((w, gamma, beta, mean, var, s, p, silu))
    return params


if __name__ == "__main__":
    key = jax.random.PRNGKey(0)
    k_in, k_par = jax.random.split(key)

    B, C_in, T = 2, 4, 128                      # input_shape = (4, 128)
    x = jax.random.normal(k_in, (B, C_in, T), jnp.float32)
    params = make_params(k_par, C_in)

    fwd = jax.jit(lambda xx: feature_network_small_forward(xx, params))
    out = jax.block_until_ready(fwd(x))

    ref = jax.block_until_ready(_reference_forward(x, params))
    assert out.shape == ref.shape == (B, 16 * 3), (out.shape, ref.shape)
    max_err = float(jnp.max(jnp.abs(out - ref)))
    assert jnp.allclose(out, ref, atol=2e-3, rtol=2e-3), max_err

    print("KERNEL_OK")
</pallas_src>

<mosaic_0001>
module attributes {stable_mosaic.version = 11 : i64} {
  func.func @kernel(%arg0: i32, %arg1: memref<1x64x128xf32, #tpu.memory_space<vmem>>, %arg2: memref<128x128xf32, #tpu.memory_space<vmem>>, %arg3: memref<256x128xf32, #tpu.memory_space<vmem>>, %arg4: memref<256x128xf32, #tpu.memory_space<vmem>>, %arg5: memref<128x128xf32, #tpu.memory_space<vmem>>, %arg6: memref<256x128xf32, #tpu.memory_space<vmem>>, %arg7: memref<128x128xf32, #tpu.memory_space<vmem>>, %arg8: memref<256x128xf32, #tpu.memory_space<vmem>>, %arg9: memref<128x128xf32, #tpu.memory_space<vmem>>, %arg10: memref<256x128xf32, #tpu.memory_space<vmem>>, %arg11: memref<128x128xf32, #tpu.memory_space<vmem>>, %arg12: memref<8x128xf32, #tpu.memory_space<vmem>>, %arg13: memref<1x3x128xf32, #tpu.memory_space<vmem>>, %arg14: memref<88x128xf32, #tpu.memory_space<vmem>>, %arg15: memref<32x128xf32, #tpu.memory_space<vmem>>, %arg16: memref<16x128xf32, #tpu.memory_space<vmem>>, %arg17: memref<8x128xf32, #tpu.memory_space<vmem>>) attributes {dimension_semantics = [#tpu.dimension_semantics<parallel>], iteration_bounds = array<i64: 2>, scalar_prefetch = 0 : i64, scratch_operands = 4 : i64, tpu.core_type = #tpu.core_type<tc>, window_params = [{transform_indices = @transform_0, window_bounds = array<i64: 1, 64, 128>}, {pipeline_mode = #tpu.pipeline_mode<synchronous>, transform_indices = @transform_1, window_bounds = array<i64: 128, 128>}, {pipeline_mode = #tpu.pipeline_mode<synchronous>, transform_indices = @transform_2, window_bounds = array<i64: 256, 128>}, {pipeline_mode = #tpu.pipeline_mode<synchronous>, transform_indices = @transform_3, window_bounds = array<i64: 256, 128>}, {pipeline_mode = #tpu.pipeline_mode<synchronous>, transform_indices = @transform_4, window_bounds = array<i64: 128, 128>}, {pipeline_mode = #tpu.pipeline_mode<synchronous>, transform_indices = @transform_5, window_bounds = array<i64: 256, 128>}, {pipeline_mode = #tpu.pipeline_mode<synchronous>, transform_indices = @transform_6, window_bounds = array<i64: 128, 128>}, {pipeline_mode = #tpu.pipeline_mode<synchronous>, transform_indices = @transform_7, window_bounds = array<i64: 256, 128>}, {pipeline_mode = #tpu.pipeline_mode<synchronous>, transform_indices = @transform_8, window_bounds = array<i64: 128, 128>}, {pipeline_mode = #tpu.pipeline_mode<synchronous>, transform_indices = @transform_9, window_bounds = array<i64: 256, 128>}, {pipeline_mode = #tpu.pipeline_mode<synchronous>, transform_indices = @transform_10, window_bounds = array<i64: 128, 128>}, {pipeline_mode = #tpu.pipeline_mode<synchronous>, transform_indices = @transform_11, window_bounds = array<i64: 8, 128>}, {transform_indices = @transform_12, window_bounds = array<i64: 1, 3, 128>}]} {
    %c0 = arith.constant 0 : index
    %c0_0 = arith.constant 0 : index
    %c0_1 = arith.constant 0 : index
    %0 = vector.load %arg1[%c0, %c0_0, %c0_1] : memref<1x64x128xf32, #tpu.memory_space<vmem>>, vector<1x64x128xf32>
    %1 = vector.shape_cast %0 : vector<1x64x128xf32> to vector<64x128xf32>
    %c0_2 = arith.constant 0 : index
    %c0_3 = arith.constant 0 : index
    %2 = vector.load %arg2[%c0_2, %c0_3] : memref<128x128xf32, #tpu.memory_space<vmem>>, vector<128x128xf32>
    %cst = arith.constant dense<0.000000e+00> : vector<64x128xf32>
    %3 = tpu.matmul %1, %2, %cst {dimension_numbers = #tpu.dot_dimension_numbers<[1], [0], [0], [1], [0, 0, 1, 1], [], []>} : vector<64x128xf32>, vector<128x128xf32>, vector<64x128xf32> -> vector<64x128xf32>
    %c0_4 = arith.constant 0 : index
    %c0_5 = arith.constant 0 : index
    %4 = vector.load %arg12[%c0_4, %c0_5] : memref<8x128xf32, #tpu.memory_space<vmem>>, vector<1x128xf32>
    %5 = vector.broadcast %4 : vector<1x128xf32> to vector<64x128xf32>
    %6 = arith.addf %3, %5 : vector<64x128xf32>
    %cst_6 = arith.constant 0.000000e+00 : f32
    %7 = vector.broadcast %cst_6 : f32 to vector<64x128xf32>
    %8 = arith.subf %7, %6 : vector<64x128xf32>
    %9 = math.exp %8 : vector<64x128xf32>
    %cst_7 = arith.constant 1.000000e+00 : f32
    %10 = vector.broadcast %cst_7 : f32 to vector<64x128xf32>
    %11 = arith.addf %10, %9 : vector<64x128xf32>
    %12 = tpu.reciprocal %11 {approx = true} : vector<64x128xf32> -> vector<64x128xf32>
    %13 = arith.mulf %6, %12 : vector<64x128xf32>
    %cst_8 = arith.constant 0.000000e+00 : f32
    %14 = vector.broadcast %cst_8 : f32 to vector<8x128xf32>
    %c0_9 = arith.constant 0 : index
    %c0_10 = arith.constant 0 : index
    %15 = vector.load %arg14[%c0_9, %c0_10] : memref<88x128xf32, #tpu.memory_space<vmem>>, vector<8x128xf32>
    tpu.vector_store %arg14[%c0_9, %c0_10], %14 {strides = array<i32>} : memref<88x128xf32, #tpu.memory_space<vmem>>, vector<8x128xf32>,
    %cst_11 = arith.constant 0.000000e+00 : f32
    %16 = vector.broadcast %cst_11 : f32 to vector<8x128xf32>
    %c40 = arith.constant 40 : index
    %c0_12 = arith.constant 0 : index
    %17 = vector.load %arg14[%c40, %c0_12] : memref<88x128xf32, #tpu.memory_space<vmem>>, vector<8x128xf32>
    tpu.vector_store %arg14[%c40, %c0_12], %16 {strides = array<i32>} : memref<88x128xf32, #tpu.memory_space<vmem>>, vector<8x128xf32>,
    %cst_13 = arith.constant 0.000000e+00 : f32
    %18 = vector.broadcast %cst_13 : f32 to vector<8x128xf32>
    %c80 = arith.constant 80 : index
    %c0_14 = arith.constant 0 : index
    %19 = vector.load %arg14[%c80, %c0_14] : memref<88x128xf32, #tpu.memory_space<vmem>>, vector<8x128xf32>
    tpu.vector_store %arg14[%c80, %c0_14], %18 {strides = array<i32>} : memref<88x128xf32, #tpu.memory_space<vmem>>, vector<8x128xf32>,
    %20 = vector.extract_strided_slice %13 {offsets = [0, 0], sizes = [32, 128], strides = [1, 1]} : vector<64x128xf32> to vector<32x128xf32>
    %c8 = arith.constant 8 : index
    %c0_15 = arith.constant 0 : index
    %21 = vector.load %arg14[%c8, %c0_15] : memref<88x128xf32, #tpu.memory_space<vmem>>, vector<32x128xf32>
    tpu.vector_store %arg14[%c8, %c0_15], %20 {strides = array<i32>} : memref<88x128xf32, #tpu.memory_space<vmem>>, vector<32x128xf32>,
    %22 = vector.extract_strided_slice %13 {offsets = [32, 0], sizes = [32, 128], strides = [1, 1]} : vector<64x128xf32> to vector<32x128xf32>
    %c48 = arith.constant 48 : index
    %c0_16 = arith.constant 0 : index
    %23 = vector.load %arg14[%c48, %c0_16] : memref<88x128xf32, #tpu.memory_space<vmem>>, vector<32x128xf32>
    tpu.vector_store %arg14[%c48, %c0_16], %22 {strides = array<i32>} : memref<88x128xf32, #tpu.memory_space<vmem>>, vector<32x128xf32>,
    %c7 = arith.constant 7 : index
    %c0_17 = arith.constant 0 : index
    %24 = vector.load %arg14[%c7, %c0_17] : memref<88x128xf32, #tpu.memory_space<vmem>>, vector<32x128xf32>
    %c47 = arith.constant 47 : index
    %c0_18 = arith.constant 0 : index
    %25 = vector.load %arg14[%c47, %c0_18] : memref<88x128xf32, #tpu.memory_space<vmem>>, vector<32x128xf32>
    %26 = tpu.concatenate %24, %25 in 1 : vector<32x128xf32>, vector<32x128xf32> -> vector<32x256xf32>
    %c0_19 = arith.constant 0 : index
    %c0_20 = arith.constant 0 : index
    %27 = vector.load %arg3[%c0_19, %c0_20] : memref<256x128xf32, #tpu.memory_space<vmem>>, vector<256x128xf32>
    %cst_21 = arith.constant dense<0.000000e+00> : vector<32x128xf32>
    %28 = tpu.matmul %26, %27, %cst_21 {dimension_numbers = #tpu.dot_dimension_numbers<[1], [0], [0], [1], [0, 0, 1, 1], [], []>} : vector<32x256xf32>, vector<256x128xf32>, vector<32x128xf32> -> vector<32x128xf32>
    %c8_22 = arith.constant 8 : index
    %c0_23 = arith.constant 0 : index
    %29 = vector.load %arg14[%c8_22, %c0_23] : memref<88x128xf32, #tpu.memory_space<vmem>>, vector<32x128xf32>
    %c48_24 = arith.constant 48 : index
    %c0_25 = arith.constant 0 : index
    %30 = vector.load %arg14[%c48_24, %c0_25] : memref<88x128xf32, #tpu.memory_space<vmem>>, vector<32x128xf32>
    %31 = tpu.concatenate %29, %30 in 1 : vector<32x128xf32>, vector<32x128xf32> -> vector<32x256xf32>
    %c0_26 = arith.constant 0 : index
    %c0_27 = arith.constant 0 : index
    %32 = vector.load %arg4[%c0_26, %c0_27] : memref<256x128xf32, #tpu.memory_space<vmem>>, vector<256x128xf32>
    %cst_28 = arith.constant dense<0.000000e+00> : vector<32x128xf32>
    %33 = tpu.matmul %31, %32, %cst_28 {dimension_numbers = #tpu.dot_dimension_numbers<[1], [0], [0], [1], [0, 0, 1, 1], [], []>} : vector<32x256xf32>, vector<256x128xf32>, vector<32x128xf32> -> vector<32x128xf32>
    %34 = arith.addf %28, %33 : vector<32x128xf32>
    %c9 = arith.constant 9 : index
    %c0_29 = arith.constant 0 : index
    %35 = vector.load %arg14[%c9, %c0_29] : memref<88x128xf32, #tpu.memory_space<vmem>>, vector<32x128xf32>
    %c0_30 = arith.constant 0 : index
    %c0_31 = arith.constant 0 : index
    %36 = vector.load %arg5[%c0_30, %c0_31] : memref<128x128xf32, #tpu.memory_space<vmem>>, vector<128x128xf32>
    %cst_32 = arith.constant dense<0.000000e+00> : vector<32x128xf32>
    %37 = tpu.matmul %35, %36, %cst_32 {dimension_numbers = #tpu.dot_dimension_numbers<[1], [0], [0], [1], [0, 0, 1, 1], [], []>} : vector<32x128xf32>, vector<128x128xf32>, vector<32x128xf32> -> vector<32x128xf32>
    %38 = arith.addf %34, %37 : vector<32x128xf32>
    %c1 = arith.constant 1 : index
    %c0_33 = arith.constant 0 : index
    %39 = vector.load %arg12[%c1, %c0_33] : memref<8x128xf32, #tpu.memory_space<vmem>>, vector<1x128xf32>
    %40 = vector.broadcast %39 : vector<1x128xf32> to vector<32x128xf32>
    %41 = arith.addf %38, %40 : vector<32x128xf32>
    %cst_34 = arith.constant 0.000000e+00 : f32
    %42 = vector.broadcast %cst_34 : f32 to vector<32x128xf32>
    %43 = arith.subf %42, %41 : vector<32x128xf32>
    %44 = math.exp %43 : vector<32x128xf32>
    %cst_35 = arith.constant 1.000000e+00 : f32
    %45 = vector.broadcast %cst_35 : f32 to vector<32x128xf32>
    %46 = arith.addf %45, %44 : vector<32x128xf32>
    %47 = tpu.reciprocal %46 {approx = true} : vector<32x128xf32> -> vector<32x128xf32>
    %48 = arith.mulf %41, %47 : vector<32x128xf32>
    %c0_36 = arith.constant 0 : index
    %c0_37 = arith.constant 0 : index
    %49 = vector.load %arg15[%c0_36, %c0_37] : memref<32x128xf32, #tpu.memory_space<vmem>>, vector<32x128xf32>
    tpu.vector_store %arg15[%c0_36, %c0_37], %48 {strides = array<i32>} : memref<32x128xf32, #tpu.memory_space<vmem>>, vector<32x128xf32>,
    %c0_38 = arith.constant 0 : index
    %c0_39 = arith.constant 0 : index
    %50 = tpu.strided_load %arg15[%c0_38, %c0_39] {strides = array<i32: 2, 1>} : memref<32x128xf32, #tpu.memory_space<vmem>>, vector<15x128xf32>
    %c1_40 = arith.constant 1 : index
    %c0_41 = arith.constant 0 : index
    %51 = tpu.strided_load %arg15[%c1_40, %c0_41] {strides = array<i32: 2, 1>} : memref<32x128xf32, #tpu.memory_space<vmem>>, vector<15x128xf32>
    %52 = tpu.concatenate %50, %51 in 1 : vector<15x128xf32>, vector<15x128xf32> -> vector<15x256xf32>
    %c0_42 = arith.constant 0 : index
    %c0_43 = arith.constant 0 : index
    %53 = vector.load %arg6[%c0_42, %c0_43] : memref<256x128xf32, #tpu.memory_space<vmem>>, vector<256x128xf32>
    %cst_44 = arith.constant dense<0.000000e+00> : vector<15x128xf32>
    %54 = tpu.matmul %52, %53, %cst_44 {dimension_numbers = #tpu.dot_dimension_numbers<[1], [0], [0], [1], [0, 0, 1, 1], [], []>} : vector<15x256xf32>, vector<256x128xf32>, vector<15x128xf32> -> vector<15x128xf32>
    %c2 = arith.constant 2 : index
    %c0_45 = arith.constant 0 : index
    %55 = tpu.strided_load %arg15[%c2, %c0_45] {strides = array<i32: 2, 1>} : memref<32x128xf32, #tpu.memory_space<vmem>>, vector<15x128xf32>
    %c0_46 = arith.constant 0 : index
    %c0_47 = arith.constant 0 : index
    %56 = vector.load %arg7[%c0_46, %c0_47] : memref<128x128xf32, #tpu.memory_space<vmem>>, vector<128x128xf32>
    %cst_48 = arith.constant dense<0.000000e+00> : vector<15x128xf32>
    %57 = tpu.matmul %55, %56, %cst_48 {dimension_numbers = #tpu.dot_dimension_numbers<[1], [0], [0], [1], [0, 0, 1, 1], [], []>} : vector<15x128xf32>, vector<128x128xf32>, vector<15x128xf32> -> vector<15x128xf32>
    %58 = arith.addf %54, %57 : vector<15x128xf32>
    %c2_49 = arith.constant 2 : index
    %c0_50 = arith.constant 0 : index
    %59 = vector.load %arg12[%c2_49, %c0_50] : memref<8x128xf32, #tpu.memory_space<vmem>>, vector<1x128xf32>
    %60 = vector.broadcast %59 : vector<1x128xf32> to vector<15x128xf32>
    %61 = arith.addf %58, %60 : vector<15x128xf32>
    %cst_51 = arith.constant 0.000000e+00 : f32
    %62 = vector.broadcast %cst_51 : f32 to vector<15x128xf32>
    %63 = arith.subf %62, %61 : vector<15x128xf32>
    %64 = math.exp %63 : vector<15x128xf32>
    %cst_52 = arith.constant 1.000000e+00 : f32
    %65 = vector.broadcast %cst_52 : f32 to vector<15x128xf32>
    %66 = arith.addf %65, %64 : vector<15x128xf32>
    %67 = tpu.reciprocal %66 {approx = true} : vector<15x128xf32> -> vector<15x128xf32>
    %68 = arith.mulf %61, %67 : vector<15x128xf32>
    %c0_53 = arith.constant 0 : index
    %c0_54 = arith.constant 0 : index
    %69 = vector.load %arg16[%c0_53, %c0_54] : memref<16x128xf32, #tpu.memory_space<vmem>>, vector<15x128xf32>
    tpu.vector_store %arg16[%c0_53, %c0_54], %68 {strides = array<i32>} : memref<16x128xf32, #tpu.memory_space<vmem>>, vector<15x128xf32>,
    %c0_55 = arith.constant 0 : index
    %c0_56 = arith.constant 0 : index
    %70 = tpu.strided_load %arg16[%c0_55, %c0_56] {strides = array<i32: 2, 1>} : memref<16x128xf32, #tpu.memory_space<vmem>>, vector<7x128xf32>
    %c1_57 = arith.constant 1 : index
    %c0_58 = arith.constant 0 : index
    %71 = tpu.strided_load %arg16[%c1_57, %c0_58] {strides = array<i32: 2, 1>} : memref<16x128xf32, #tpu.memory_space<vmem>>, vector<7x128xf32>
    %72 = tpu.concatenate %70, %71 in 1 : vector<7x128xf32>, vector<7x128xf32> -> vector<7x256xf32>
    %c0_59 = arith.constant 0 : index
    %c0_60 = arith.constant 0 : index
    %73 = vector.load %arg8[%c0_59, %c0_60] : memref<256x128xf32, #tpu.memory_space<vmem>>, vector<256x128xf32>
    %cst_61 = arith.constant dense<0.000000e+00> : vector<7x128xf32>
    %74 = tpu.matmul %72, %73, %cst_61 {dimension_numbers = #tpu.dot_dimension_numbers<[1], [0], [0], [1], [0, 0, 1, 1], [], []>} : vector<7x256xf32>, vector<256x128xf32>, vector<7x128xf32> -> vector<7x128xf32>
    %c2_62 = arith.constant 2 : index
    %c0_63 = arith.constant 0 : index
    %75 = tpu.strided_load %arg16[%c2_62, %c0_63] {strides = array<i32: 2, 1>} : memref<16x128xf32, #tpu.memory_space<vmem>>, vector<7x128xf32>
    %c0_64 = arith.constant 0 : index
    %c0_65 = arith.constant 0 : index
    %76 = vector.load %arg9[%c0_64, %c0_65] : memref<128x128xf32, #tpu.memory_space<vmem>>, vector<128x128xf32>
    %cst_66 = arith.constant dense<0.000000e+00> : vector<7x128xf32>
    %77 = tpu.matmul %75, %76, %cst_66 {dimension_numbers = #tpu.dot_dimension_numbers<[1], [0], [0], [1], [0, 0, 1, 1], [], []>} : vector<7x128xf32>, vector<128x128xf32>, vector<7x128xf32> -> vector<7x128xf32>
    %78 = arith.addf %74, %77 : vector<7x128xf32>
    %c3 = arith.constant 3 : index
    %c0_67 = arith.constant 0 : index
    %79 = vector.load %arg12[%c3, %c0_67] : memref<8x128xf32, #tpu.memory_space<vmem>>, vector<1x128xf32>
    %80 = vector.broadcast %79 : vector<1x128xf32> to vector<7x128xf32>
    %81 = arith.addf %78, %80 : vector<7x128xf32>
    %cst_68 = arith.constant 0.000000e+00 : f32
    %82 = vector.broadcast %cst_68 : f32 to vector<7x128xf32>
    %83 = arith.subf %82, %81 : vector<7x128xf32>
    %84 = math.exp %83 : vector<7x128xf32>
    %cst_69 = arith.constant 1.000000e+00 : f32
    %85 = vector.broadcast %cst_69 : f32 to vector<7x128xf32>
    %86 = arith.addf %85, %84 : vector<7x128xf32>
    %87 = tpu.reciprocal %86 {approx = true} : vector<7x128xf32> -> vector<7x128xf32>
    %88 = arith.mulf %81, %87 : vector<7x128xf32>
    %c0_70 = arith.constant 0 : index
    %c0_71 = arith.constant 0 : index
    %89 = vector.load %arg17[%c0_70, %c0_71] : memref<8x128xf32, #tpu.memory_space<vmem>>, vector<7x128xf32>
    tpu.vector_store %arg17[%c0_70, %c0_71], %88 {strides = array<i32>} : memref<8x128xf32, #tpu.memory_space<vmem>>, vector<7x128xf32>,
    %c0_72 = arith.constant 0 : index
    %c0_73 = arith.constant 0 : index
    %90 = tpu.strided_load %arg17[%c0_72, %c0_73] {strides = array<i32: 2, 1>} : memref<8x128xf32, #tpu.memory_space<vmem>>, vector<3x128xf32>
    %c1_74 = arith.constant 1 : index
    %c0_75 = arith.constant 0 : index
    %91 = tpu.strided_load %arg17[%c1_74, %c0_75] {strides = array<i32: 2, 1>} : memref<8x128xf32, #tpu.memory_space<vmem>>, vector<3x128xf32>
    %92 = tpu.concatenate %90, %91 in 1 : vector<3x128xf32>, vector<3x128xf32> -> vector<3x256xf32>
    %c0_76 = arith.constant 0 : index
    %c0_77 = arith.constant 0 : index
    %93 = vector.load %arg10[%c0_76, %c0_77] : memref<256x128xf32, #tpu.memory_space<vmem>>, vector<256x128xf32>
    %cst_78 = arith.constant dense<0.000000e+00> : vector<3x128xf32>
    %94 = tpu.matmul %92, %93, %cst_78 {dimension_numbers = #tpu.dot_dimension_numbers<[1], [0], [0], [1], [0, 0, 1, 1], [], []>} : vector<3x256xf32>, vector<256x128xf32>, vector<3x128xf32> -> vector<3x128xf32>
    %c2_79 = arith.constant 2 : index
    %c0_80 = arith.constant 0 : index
    %95 = tpu.strided_load %arg17[%c2_79, %c0_80] {strides = array<i32: 2, 1>} : memref<8x128xf32, #tpu.memory_space<vmem>>, vector<3x128xf32>
    %c0_81 = arith.constant 0 : index
    %c0_82 = arith.constant 0 : index
    %96 = vector.load %arg11[%c0_81, %c0_82] : memref<128x128xf32, #tpu.memory_space<vmem>>, vector<128x128xf32>
    %cst_83 = arith.constant dense<0.000000e+00> : vector<3x128xf32>
    %97 = tpu.matmul %95, %96, %cst_83 {dimension_numbers = #tpu.dot_dimension_numbers<[1], [0], [0], [1], [0, 0, 1, 1], [], []>} : vector<3x128xf32>, vector<128x128xf32>, vector<3x128xf32> -> vector<3x128xf32>
    %98 = arith.addf %94, %97 : vector<3x128xf32>
    %c4 = arith.constant 4 : index
    %c0_84 = arith.constant 0 : index
    %99 = vector.load %arg12[%c4, %c0_84] : memref<8x128xf32, #tpu.memory_space<vmem>>, vector<1x128xf32>
    %100 = vector.broadcast %99 : vector<1x128xf32> to vector<3x128xf32>
    %101 = arith.addf %98, %100 : vector<3x128xf32>
    %c0_85 = arith.constant 0 : index
    %c0_86 = arith.constant 0 : index
    %c0_87 = arith.constant 0 : index
    %102 = vector.load %arg13[%c0_85, %c0_86, %c0_87] : memref<1x3x128xf32, #tpu.memory_space<vmem>>, vector<1x3x128xf32>
    %103 = vector.shape_cast %102 : vector<1x3x128xf32> to vector<3x128xf32>
    %104 = vector.shape_cast %101 : vector<3x128xf32> to vector<1x3x128xf32>
    tpu.vector_store %arg13[%c0_85, %c0_86, %c0_87], %104 {strides = array<i32>} : memref<1x3x128xf32, #tpu.memory_space<vmem>>, vector<1x3x128xf32>,
    return
  }
  func.func @transform_0(%arg0: i32) -> (i32, i32, i32) {
    %c0_i32 = arith.constant 0 : i32
    %c0_i32_0 = arith.constant 0 : i32
    %c0_i32_1 = arith.constant 0 : i32
    return %arg0, %c0_i32, %c0_i32_0 : i32, i32, i32
  }
  func.func @transform_1(%arg0: i32) -> (i32, i32) {
    %c0_i32 = arith.constant 0 : i32
    %c0_i32_0 = arith.constant 0 : i32
    %c0_i32_1 = arith.constant 0 : i32
    return %c0_i32, %c0_i32_0 : i32, i32
  }
  func.func @transform_2(%arg0: i32) -> (i32, i32) {
    %c0_i32 = arith.constant 0 : i32
    %c0_i32_0 = arith.constant 0 : i32
    %c0_i32_1 = arith.constant 0 : i32
    return %c0_i32, %c0_i32_0 : i32, i32
  }
  func.func @transform_3(%arg0: i32) -> (i32, i32) {
    %c0_i32 = arith.constant 0 : i32
    %c0_i32_0 = arith.constant 0 : i32
    %c0_i32_1 = arith.constant 0 : i32
    return %c0_i32, %c0_i32_0 : i32, i32
  }
  func.func @transform_4(%arg0: i32) -> (i32, i32) {
    %c0_i32 = arith.constant 0 : i32
    %c0_i32_0 = arith.constant 0 : i32
    %c0_i32_1 = arith.constant 0 : i32
    return %c0_i32, %c0_i32_0 : i32, i32
  }
  func.func @transform_5(%arg0: i32) -> (i32, i32) {
    %c0_i32 = arith.constant 0 : i32
    %c0_i32_0 = arith.constant 0 : i32
    %c0_i32_1 = arith.constant 0 : i32
    return %c0_i32, %c0_i32_0 : i32, i32
  }
  func.func @transform_6(%arg0: i32) -> (i32, i32) {
    %c0_i32 = arith.constant 0 : i32
    %c0_i32_0 = arith.constant 0 : i32
    %c0_i32_1 = arith.constant 0 : i32
    return %c0_i32, %c0_i32_0 : i32, i32
  }
  func.func @transform_7(%arg0: i32) -> (i32, i32) {
    %c0_i32 = arith.constant 0 : i32
    %c0_i32_0 = arith.constant 0 : i32
    %c0_i32_1 = arith.constant 0 : i32
    return %c0_i32, %c0_i32_0 : i32, i32
  }
  func.func @transform_8(%arg0: i32) -> (i32, i32) {
    %c0_i32 = arith.constant 0 : i32
    %c0_i32_0 = arith.constant 0 : i32
    %c0_i32_1 = arith.constant 0 : i32
    return %c0_i32, %c0_i32_0 : i32, i32
  }
  func.func @transform_9(%arg0: i32) -> (i32, i32) {
    %c0_i32 = arith.constant 0 : i32
    %c0_i32_0 = arith.constant 0 : i32
    %c0_i32_1 = arith.constant 0 : i32
    return %c0_i32, %c0_i32_0 : i32, i32
  }
  func.func @transform_10(%arg0: i32) -> (i32, i32) {
    %c0_i32 = arith.constant 0 : i32
    %c0_i32_0 = arith.constant 0 : i32
    %c0_i32_1 = arith.constant 0 : i32
    return %c0_i32, %c0_i32_0 : i32, i32
  }
  func.func @transform_11(%arg0: i32) -> (i32, i32) {
    %c0_i32 = arith.constant 0 : i32
    %c0_i32_0 = arith.constant 0 : i32
    %c0_i32_1 = arith.constant 0 : i32
    return %c0_i32, %c0_i32_0 : i32, i32
  }
  func.func @transform_12(%arg0: i32) -> (i32, i32, i32) {
    %c0_i32 = arith.constant 0 : i32
    %c0_i32_0 = arith.constant 0 : i32
    %c0_i32_1 = arith.constant 0 : i32
    return %arg0, %c0_i32, %c0_i32_0 : i32, i32, i32
  }
}

</mosaic_0001>

<llo_original>
// kernel: _lambda_.1
$region0: #{_lambda_.1}
  #allocation0 [shape = 'u32[]', space=smem, size = 0x4, offset = 0x4, fixed_abs, tag = 'smem constant byte address 0x4 - core index']
  #allocation1 [shape = 'u32[144,128]{1,0:T(1,128)}', space=vmem, size = 0x12000, scoped, tag = 'internal scratch']
  #allocation2 [shape = 'f32[88,128]{1,0:T(8,128)}', space=vmem, size = 0xb000, scoped, tag = 'scratch operand']
  #allocation3 [shape = 'f32[32,128]{1,0:T(8,128)}', space=vmem, size = 0x4000, scoped, tag = 'scratch operand']
  #allocation4 [shape = 'f32[16,128]{1,0:T(8,128)}', space=vmem, size = 0x2000, scoped, tag = 'scratch operand']
  #allocation5 [shape = 'f32[8,128]{1,0:T(8,128)}', space=vmem, size = 0x1000, scoped, tag = 'scratch operand']
  %s0 = inlined_call_operand.vmem [shape: f32[2,64,128], index: 0, kind: input, shape index: {}]
  %s1 = inlined_call_operand.hbm [shape: f32[128,128], index: 1, kind: input, shape index: {}]
  %s2 = inlined_call_operand.hbm [shape: f32[256,128], index: 2, kind: input, shape index: {}]
  %s3 = inlined_call_operand.vmem [shape: f32[256,128], index: 3, kind: input, shape index: {}]
  %s4 = inlined_call_operand.hbm [shape: f32[128,128], index: 4, kind: input, shape index: {}]
  %s5 = inlined_call_operand.vmem [shape: f32[256,128], index: 5, kind: input, shape index: {}]
  %s6 = inlined_call_operand.hbm [shape: f32[128,128], index: 6, kind: input, shape index: {}]
  %s7 = inlined_call_operand.vmem [shape: f32[256,128], index: 7, kind: input, shape index: {}]
  %s8 = inlined_call_operand.hbm [shape: f32[128,128], index: 8, kind: input, shape index: {}]
  %s9 = inlined_call_operand.vmem [shape: f32[256,128], index: 9, kind: input, shape index: {}]
  %s10 = inlined_call_operand.hbm [shape: f32[128,128], index: 10, kind: input, shape index: {}]
  %s11 = inlined_call_operand.vmem [shape: f32[8,128], index: 11, kind: input, shape index: {}]
  %s12 = inlined_call_operand.vmem [shape: f32[2,3,128], index: 12, kind: output, shape index: {}]
  %s13 = sld [smem:[#allocation0]]
  $region105: #{_lambda_.1} parent=0
    _
  %s15 = ssub.s32 1, %s13
  %s16 = scalar_select 0, %s15, %s13
  $region1: #{_lambda_.1} parent=0
    #allocation6 [shape = 'u8[65536]{0}', space=vmem, size = 0x10000, scoped, tag = 'input window, operand 1, single buffered']
    #allocation7 [shape = 's32[2]{0}', space=sflag, size = 0x8, scoped, tag = 'scoped memory for _lambda_.1']
    #allocation8 [shape = 'u8[131072]{0}', space=vmem, size = 0x20000, scoped, tag = 'input window, operand 2, single buffered']
    #allocation9 [shape = 's32[1]{0}', space=sflag, size = 0x4, scoped, tag = 'scoped memory for _lambda_.1']
    #allocation10 [shape = 'u8[65536]{0}', space=vmem, size = 0x10000, scoped, tag = 'input window, operand 4, single buffered']
    #allocation11 [shape = 'u8[65536]{0}', space=vmem, size = 0x10000, scoped, tag = 'input window, operand 6, single buffered']
    #allocation12 [shape = 's32[1]{0}', space=sflag, size = 0x4, scoped, tag = 'scoped memory for _lambda_.1']
    #allocation13 [shape = 'u8[65536]{0}', space=vmem, size = 0x10000, scoped, tag = 'input window, operand 8, single buffered']
    #allocation14 [shape = 'u8[65536]{0}', space=vmem, size = 0x10000, scoped, tag = 'input window, operand 10, single buffered']
    #allocation15 [shape = 's32[1]{0}', space=sflag, size = 0x4, scoped, tag = 'scoped memory for _lambda_.1']
    %17 = vsyncpa [#allocation7], 0
    %18 = vsyncpa [#allocation9], 0
    %19 = vsyncpa [#allocation12], 0
    %20 = vsyncpa [#allocation15], 0
    loop: start=0, step=1, limit=4
    $region2: #{_lambda_.1} parent=1 // loop_pre_header
      _
    $region3: #{_lambda_.1} parent=1 // loop_header
      %s22 = sphi 0, %s26
      %p23 = scmp.ge.s32.totalorder %s22, 4
      %s32 = sphi 0, %s34
      %s35 = sphi 0, %s32
      %s36 = sphi 0, %s35
      %s52 = sphi 0, %s36
      %s56 = sphi 0, %s56
      %s58 = sphi 0, %s56
      %s59 = sphi 0, %s58
      %s73 = sphi 0, %s59
      %s77 = sphi 0, %s77
      %s79 = sphi 0, %s77
      %s80 = sphi 0, %s79
      %s94 = sphi 0, %s80
      %s98 = sphi 0, %s98
      %s100 = sphi 0, %s98
      %s101 = sphi 0, %s100
      %s115 = sphi 0, %s101
      %s119 = sphi 0, %s119
      %s121 = sphi 0, %s119
      %s122 = sphi 0, %s121
      %s136 = sphi 0, %s122
      %s140 = sphi 0, %s140
      %s142 = sphi 0, %s140
      %s143 = sphi 0, %s142
      %s157 = sphi 0, %s143
      %s161 = sphi 0, %s161
      %s163 = sphi 0, %s161
      %s164 = sphi 0, %s163
      %s178 = sphi 0, %s164
      %s182 = sphi 0, %s182
      %s184 = sphi 0, %s182
      %s185 = sphi 0, %s184
      %s199 = sphi 0, %s185
      %s203 = sphi 0, %s203
      %s205 = sphi 0, %s203
      %s206 = sphi 0, %s205
      %s220 = sphi 0, %s206
      %s224 = sphi 0, %s224
      %s226 = sphi 0, %s224
      %s227 = sphi 0, %s226
      %s241 = sphi 0, %s227
      %s245 = sphi 0, %s245
      %s247 = sphi 0, %s245
      %s248 = sphi 0, %s247
      %s262 = sphi 0, %s248
      %s266 = sphi 0, %s266
      %s268 = sphi 0, %s266
      %s269 = sphi 0, %s268
      %s283 = sphi 0, %s269
      %s289 = sphi 0, %s291
      %s292 = sphi 0, %s289
      %s293 = sphi 0, %s292
      %s309 = sphi 0, %s293
    $region4: #{_lambda_.1} parent=1 // loop_header_branch
      %25 = sbr.rel (%p23) target = $region8
    $region5: #{_lambda_.1} parent=1 // loop_body
      %s27 = ssub.s32 %s22, 1
      %s28 = ssub.s32 %s22, 2
      %s29 = sadd.s32 %s22, 1
      %s30 = ssub.s32 %s22, %s29
      %p31 = scmp.eq.s32.totalorder %s30, 0
      %s33 = sadd.s32 %s32, 1
      %s34 = scalar_select %p31, %s32, %s33
      %p37 = pneg %p31
      %p38 = scmp.eq.s32.totalorder %s22, 1
      %p39 = por %p37, %p38
      %p40 = scmp.ne.s32.totalorder %s32, %s35
      %p41 = scmp.eq.s32.totalorder %s22, 0
      %p42 = por %p40, %p41
      %p43 = scmp.ne.s32.totalorder %s32, %s35
      %p44 = scmp.eq.s32.totalorder %s27, 1
      %p45 = por %p43, %p44
      %p46 = scmp.ne.s32.totalorder %s35, %s36
      %p47 = scmp.eq.s32.totalorder %s27, 0
      %p48 = por %p46, %p47
      %p49 = scmp.ne.s32.totalorder %s35, %s36
      %p50 = scmp.eq.s32.totalorder %s28, 1
      %p51 = por %p49, %p50
      %p53 = scmp.ne.s32.totalorder %s36, %s52
      %p54 = scmp.eq.s32.totalorder %s28, 0
      %p55 = por %p53, %p54
      %s57 = sadd.s32 %s56, 1
      %p60 = scmp.eq.s32.totalorder %s22, 1
      %p61 = scmp.ne.s32.totalorder %s56, %s58
      %p62 = scmp.eq.s32.totalorder %s22, 0
      %p63 = por %p61, %p62
      %p64 = scmp.ne.s32.totalorder %s56, %s58
      %p65 = scmp.eq.s32.totalorder %s27, 1
      %p66 = por %p64, %p65
      %p67 = scmp.ne.s32.totalorder %s58, %s59
      %p68 = scmp.eq.s32.totalorder %s27, 0
      %p69 = por %p67, %p68
      %p70 = scmp.ne.s32.totalorder %s58, %s59
      %p71 = scmp.eq.s32.totalorder %s28, 1
      %p72 = por %p70, %p71
      %p74 = scmp.ne.s32.totalorder %s59, %s73
      %p75 = scmp.eq.s32.totalorder %s28, 0
      %p76 = por %p74, %p75
      %s78 = sadd.s32 %s77, 1
      %p81 = scmp.eq.s32.totalorder %s22, 1
      %p82 = scmp.ne.s32.totalorder %s77, %s79
      %p83 = scmp.eq.s32.totalorder %s22, 0
      %p84 = por %p82, %p83
      %p85 = scmp.ne.s32.totalorder %s77, %s79
      %p86 = scmp.eq.s32.totalorder %s27, 1
      %p87 = por %p85, %p86
      %p88 = scmp.ne.s32.totalorder %s79, %s80
      %p89 = scmp.eq.s32.totalorder %s27, 0
      %p90 = por %p88, %p89
      %p91 = scmp.ne.s32.totalorder %s79, %s80
      %p92 = scmp.eq.s32.totalorder %s28, 1
      %p93 = por %p91, %p92
      %p95 = scmp.ne.s32.totalorder %s80, %s94
      %p96 = scmp.eq.s32.totalorder %s28, 0
      %p97 = por %p95, %p96
      %s99 = sadd.s32 %s98, 1
      %p102 = scmp.eq.s32.totalorder %s22, 1
      %p103 = scmp.ne.s32.totalorder %s98, %s100
      %p104 = scmp.eq.s32.totalorder %s22, 0
      %p105 = por %p103, %p104
      %p106 = scmp.ne.s32.totalorder %s98, %s100
      %p107 = scmp.eq.s32.totalorder %s27, 1
      %p108 = por %p106, %p107
      %p109 = scmp.ne.s32.totalorder %s100, %s101
      %p110 = scmp.eq.s32.totalorder %s27, 0
      %p111 = por %p109, %p110
      %p112 = scmp.ne.s32.totalorder %s100, %s101
      %p113 = scmp.eq.s32.totalorder %s28, 1
      %p114 = por %p112, %p113
      %p116 = scmp.ne.s32.totalorder %s101, %s115
      %p117 = scmp.eq.s32.totalorder %s28, 0
      %p118 = por %p116, %p117
      %s120 = sadd.s32 %s119, 1
      %p123 = scmp.eq.s32.totalorder %s22, 1
      %p124 = scmp.ne.s32.totalorder %s119, %s121
      %p125 = scmp.eq.s32.totalorder %s22, 0
      %p126 = por %p124, %p125
      %p127 = scmp.ne.s32.totalorder %s119, %s121
      %p128 = scmp.eq.s32.totalorder %s27, 1
      %p129 = por %p127, %p128
      %p130 = scmp.ne.s32.totalorder %s121, %s122
      %p131 = scmp.eq.s32.totalorder %s27, 0
      %p132 = por %p130, %p131
      %p133 = scmp.ne.s32.totalorder %s121, %s122
      %p134 = scmp.eq.s32.totalorder %s28, 1
      %p135 = por %p133, %p134
      %p137 = scmp.ne.s32.totalorder %s122, %s136
      %p138 = scmp.eq.s32.totalorder %s28, 0
      %p139 = por %p137, %p138
      %s141 = sadd.s32 %s140, 1
      %p144 = scmp.eq.s32.totalorder %s22, 1
      %p145 = scmp.ne.s32.totalorder %s140, %s142
      %p146 = scmp.eq.s32.totalorder %s22, 0
      %p147 = por %p145, %p146
      %p148 = scmp.ne.s32.totalorder %s140, %s142
      %p149 = scmp.eq.s32.totalorder %s27, 1
      %p150 = por %p148, %p149
      %p151 = scmp.ne.s32.totalorder %s142, %s143
      %p152 = scmp.eq.s32.totalorder %s27, 0
      %p153 = por %p151, %p152
      %p154 = scmp.ne.s32.totalorder %s142, %s143
      %p155 = scmp.eq.s32.totalorder %s28, 1
      %p156 = por %p154, %p155
      %p158 = scmp.ne.s32.totalorder %s143, %s157
      %p159 = scmp.eq.s32.totalorder %s28, 0
      %p160 = por %p158, %p159
      %s162 = sadd.s32 %s161, 1
      %p165 = scmp.eq.s32.totalorder %s22, 1
      %p166 = scmp.ne.s32.totalorder %s161, %s163
      %p167 = scmp.eq.s32.totalorder %s22, 0
      %p168 = por %p166, %p167
      %p169 = scmp.ne.s32.totalorder %s161, %s163
      %p170 = scmp.eq.s32.totalorder %s27, 1
      %p171 = por %p169, %p170
      %p172 = scmp.ne.s32.totalorder %s163, %s164
      %p173 = scmp.eq.s32.totalorder %s27, 0
      %p174 = por %p172, %p173
      %p175 = scmp.ne.s32.totalorder %s163, %s164
      %p176 = scmp.eq.s32.totalorder %s28, 1
      %p177 = por %p175, %p176
      %p179 = scmp.ne.s32.totalorder %s164, %s178
      %p180 = scmp.eq.s32.totalorder %s28, 0
      %p181 = por %p179, %p180
      %s183 = sadd.s32 %s182, 1
      %p186 = scmp.eq.s32.totalorder %s22, 1
      %p187 = scmp.ne.s32.totalorder %s182, %s184
      %p188 = scmp.eq.s32.totalorder %s22, 0
      %p189 = por %p187, %p188
      %p190 = scmp.ne.s32.totalorder %s182, %s184
      %p191 = scmp.eq.s32.totalorder %s27, 1
      %p192 = por %p190, %p191
      %p193 = scmp.ne.s32.totalorder %s184, %s185
      %p194 = scmp.eq.s32.totalorder %s27, 0
      %p195 = por %p193, %p194
      %p196 = scmp.ne.s32.totalorder %s184, %s185
      %p197 = scmp.eq.s32.totalorder %s28, 1
      %p198 = por %p196, %p197
      %p200 = scmp.ne.s32.totalorder %s185, %s199
      %p201 = scmp.eq.s32.totalorder %s28, 0
      %p202 = por %p200, %p201
      %s204 = sadd.s32 %s203, 1
      %p207 = scmp.eq.s32.totalorder %s22, 1
      %p208 = scmp.ne.s32.totalorder %s203, %s205
      %p209 = scmp.eq.s32.totalorder %s22, 0
      %p210 = por %p208, %p209
      %p211 = scmp.ne.s32.totalorder %s203, %s205
      %p212 = scmp.eq.s32.totalorder %s27, 1
      %p213 = por %p211, %p212
      %p214 = scmp.ne.s32.totalorder %s205, %s206
      %p215 = scmp.eq.s32.totalorder %s27, 0
      %p216 = por %p214, %p215
      %p217 = scmp.ne.s32.totalorder %s205, %s206
      %p218 = scmp.eq.s32.totalorder %s28, 1
      %p219 = por %p217, %p218
      %p221 = scmp.ne.s32.totalorder %s206, %s220
      %p222 = scmp.eq.s32.totalorder %s28, 0
      %p223 = por %p221, %p222
      %s225 = sadd.s32 %s224, 1
      %p228 = scmp.eq.s32.totalorder %s22, 1
      %p229 = scmp.ne.s32.totalorder %s224, %s226
      %p230 = scmp.eq.s32.totalorder %s22, 0
      %p231 = por %p229, %p230
      %p232 = scmp.ne.s32.totalorder %s224, %s226
      %p233 = scmp.eq.s32.totalorder %s27, 1
      %p234 = por %p232, %p233
      %p235 = scmp.ne.s32.totalorder %s226, %s227
      %p236 = scmp.eq.s32.totalorder %s27, 0
      %p237 = por %p235, %p236
      %p238 = scmp.ne.s32.totalorder %s226, %s227
      %p239 = scmp.eq.s32.totalorder %s28, 1
      %p240 = por %p238, %p239
      %p242 = scmp.ne.s32.totalorder %s227, %s241
      %p243 = scmp.eq.s32.totalorder %s28, 0
      %p244 = por %p242, %p243
      %s246 = sadd.s32 %s245, 1
      %p249 = scmp.eq.s32.totalorder %s22, 1
      %p250 = scmp.ne.s32.totalorder %s245, %s247
      %p251 = scmp.eq.s32.totalorder %s22, 0
      %p252 = por %p250, %p251
      %p253 = scmp.ne.s32.totalorder %s245, %s247
      %p254 = scmp.eq.s32.totalorder %s27, 1
      %p255 = por %p253, %p254
      %p256 = scmp.ne.s32.totalorder %s247, %s248
      %p257 = scmp.eq.s32.totalorder %s27, 0
      %p258 = por %p256, %p257
      %p259 = scmp.ne.s32.totalorder %s247, %s248
      %p260 = scmp.eq.s32.totalorder %s28, 1
      %p261 = por %p259, %p260
      %p263 = scmp.ne.s32.totalorder %s248, %s262
      %p264 = scmp.eq.s32.totalorder %s28, 0
      %p265 = por %p263, %p264
      %s267 = sadd.s32 %s266, 1
      %p270 = scmp.eq.s32.totalorder %s22, 1
      %p271 = scmp.ne.s32.totalorder %s266, %s268
      %p272 = scmp.eq.s32.totalorder %s22, 0
      %p273 = por %p271, %p272
      %p274 = scmp.ne.s32.totalorder %s266, %s268
      %p275 = scmp.eq.s32.totalorder %s27, 1
      %p276 = por %p274, %p275
      %p277 = scmp.ne.s32.totalorder %s268, %s269
      %p278 = scmp.eq.s32.totalorder %s27, 0
      %p279 = por %p277, %p278
      %p280 = scmp.ne.s32.totalorder %s268, %s269
      %p281 = scmp.eq.s32.totalorder %s28, 1
      %p282 = por %p280, %p281
      %p284 = scmp.ne.s32.totalorder %s269, %s283
      %p285 = scmp.eq.s32.totalorder %s28, 0
      %p286 = por %p284, %p285
      %s287 = ssub.s32 %s22, %s29
      %p288 = scmp.eq.s32.totalorder %s287, 0
      %s290 = sadd.s32 %s289, 1
      %s291 = scalar_select %p288, %s289, %s290
      %p294 = pneg %p288
      %p295 = scmp.eq.s32.totalorder %s22, 1
      %p296 = por %p294, %p295
      %p297 = scmp.ne.s32.totalorder %s289, %s292
      %p298 = scmp.eq.s32.totalorder %s22, 0
      %p299 = por %p297, %p298
      %p300 = scmp.ne.s32.totalorder %s289, %s292
      %p301 = scmp.eq.s32.totalorder %s27, 1
      %p302 = por %p300, %p301
      %p303 = scmp.ne.s32.totalorder %s292, %s293
      %p304 = scmp.eq.s32.totalorder %s27, 0
      %p305 = por %p303, %p304
      %p306 = scmp.ne.s32.totalorder %s292, %s293
      %p307 = scmp.eq.s32.totalorder %s28, 1
      %p308 = por %p306, %p307
      %p310 = scmp.ne.s32.totalorder %s293, %s309
      %p311 = scmp.eq.s32.totalorder %s28, 0
      %p312 = por %p310, %p311
      %p313 = scmp.le.s32.totalorder 1, %s22
      %p314 = scmp.lt.s32.totalorder %s22, 3
      %p315 = pnand %p313, %p314
      %p316 = pneg %p315
      // Predicated region
      $region9: #{_lambda_.1} parent=5 // pred_check
        _
      $region10: #{_lambda_.1} parent=5 // pred_check_branch
        %318 = sbr.rel (%p315) target = $region12
      $region11: #{_lambda_.1} parent=5 // pred_region
        %s319 = ssub.s32 %s22, 1
        // Predicated region
        $region13: #{_lambda_.1} parent=11 // pred_check
          %p320 = pneg %p69
        $region14: #{_lambda_.1} parent=11 // pred_check_branch
          %322 = sbr.rel (%p320) target = $region16
        $region15: #{_lambda_.1} parent=11 // pred_region
          %s324 = ssub.s32 2048, 2048
          %325 = vsyncadd [#allocation7], %s324
          %s326 = sshll.u32 [#allocation6], 4
          %s327 = int_to_ptr.vmem [resolvable:$true] %s326
          %332 = dma.hbm_to_vmem [thread:$0]  %s1, 2048, %s327, [#allocation7], 128, 128, 8
        $region16: #{_lambda_.1} parent=11 // pred_fallthru
          _
        // Predicated region
        $region17: #{_lambda_.1} parent=11 // pred_check
          %p333 = pneg %p90
        $region18: #{_lambda_.1} parent=11 // pred_check_branch
          %335 = sbr.rel (%p333) target = $region20
        $region19: #{_lambda_.1} parent=11 // pred_region
          %s337 = ssub.s32 4096, 4096
          %338 = vsyncadd [#allocation9], %s337
          %s339 = sshll.u32 [#allocation8], 4
          %s340 = int_to_ptr.vmem [resolvable:$true] %s339
          %345 = dma.hbm_to_vmem [thread:$0]  %s2, 4096, %s340, [#allocation9], 128, 128, 8
        $region20: #{_lambda_.1} parent=11 // pred_fallthru
          _
        // Predicated region
        $region21: #{_lambda_.1} parent=11 // pred_check
          %p346 = pneg %p111
        $region22: #{_lambda_.1} parent=11 // pred_check_branch
          %348 = sbr.rel (%p346) target = $region24
        $region23: #{_lambda_.1} parent=11 // pred_region
          _
        $region24: #{_lambda_.1} parent=11 // pred_fallthru
          _
        // Predicated region
        $region25: #{_lambda_.1} parent=11 // pred_check
          %p349 = pneg %p132
        $region26: #{_lambda_.1} parent=11 // pred_check_branch
          %351 = sbr.rel (%p349) target = $region28
        $region27: #{_lambda_.1} parent=11 // pred_region
          %s353 = ssub.s32 2048, 2048
          %354 = vsyncadd [#allocation9], %s353
          %s355 = sshll.u32 [#allocation10], 4
          %s356 = int_to_ptr.vmem [resolvable:$true] %s355
          %361 = dma.hbm_to_vmem [thread:$0]  %s4, 2048, %s356, [#allocation9], 128, 128, 8
        $region28: #{_lambda_.1} parent=11 // pred_fallthru
          _
        // Predicated region
        $region29: #{_lambda_.1} parent=11 // pred_check
          %p362 = pneg %p153
        $region30: #{_lambda_.1} parent=11 // pred_check_branch
          %364 = sbr.rel (%p362) target = $region32
        $region31: #{_lambda_.1} parent=11 // pred_region
          _
        $region32: #{_lambda_.1} parent=11 // pred_fallthru
          _
        // Predicated region
        $region33: #{_lambda_.1} parent=11 // pred_check
          %p365 = pneg %p174
        $region34: #{_lambda_.1} parent=11 // pred_check_branch
          %367 = sbr.rel (%p365) target = $region36
        $region35: #{_lambda_.1} parent=11 // pred_region
          %s369 = ssub.s32 2048, 2048
          %370 = vsyncadd [#allocation12], %s369
          %s371 = sshll.u32 [#allocation11], 4
          %s372 = int_to_ptr.vmem [resolvable:$true] %s371
          %377 = dma.hbm_to_vmem [thread:$0]  %s6, 2048, %s372, [#allocation12], 128, 128, 8
        $region36: #{_lambda_.1} parent=11 // pred_fallthru
          _
        // Predicated region
        $region37: #{_lambda_.1} parent=11 // pred_check
          %p378 = pneg %p195
        $region38: #{_lambda_.1} parent=11 // pred_check_branch
          %380 = sbr.rel (%p378) target = $region40
        $region39: #{_lambda_.1} parent=11 // pred_region
          _
        $region40: #{_lambda_.1} parent=11 // pred_fallthru
          _
        // Predicated region
        $region41: #{_lambda_.1} parent=11 // pred_check
          %p381 = pneg %p216
        $region42: #{_lambda_.1} parent=11 // pred_check_branch
          %383 = sbr.rel (%p381) target = $region44
        $region43: #{_lambda_.1} parent=11 // pred_region
          %s385 = ssub.s32 2048, 2048
          %386 = vsyncadd [#allocation12], %s385
          %s387 = sshll.u32 [#allocation13], 4
          %s388 = int_to_ptr.vmem [resolvable:$true] %s387
          %393 = dma.hbm_to_vmem [thread:$0]  %s8, 2048, %s388, [#allocation12], 128, 128, 8
        $region44: #{_lambda_.1} parent=11 // pred_fallthru
          _
        // Predicated region
        $region45: #{_lambda_.1} parent=11 // pred_check
          %p394 = pneg %p237
        $region46: #{_lambda_.1} parent=11 // pred_check_branch
          %396 = sbr.rel (%p394) target = $region48
        $region47: #{_lambda_.1} parent=11 // pred_region
          _
        $region48: #{_lambda_.1} parent=11 // pred_fallthru
          _
        // Predicated region
        $region49: #{_lambda_.1} parent=11 // pred_check
          %p397 = pneg %p258
        $region50: #{_lambda_.1} parent=11 // pred_check_branch
          %399 = sbr.rel (%p397) target = $region52
        $region51: #{_lambda_.1} parent=11 // pred_region
          %s401 = ssub.s32 2048, 2048
          %402 = vsyncadd [#allocation15], %s401
          %s403 = sshll.u32 [#allocation14], 4
          %s404 = int_to_ptr.vmem [resolvable:$true] %s403
          %409 = dma.hbm_to_vmem [thread:$0]  %s10, 2048, %s404, [#allocation15], 128, 128, 8
        $region52: #{_lambda_.1} parent=11 // pred_fallthru
          _
        // Predicated region
        $region53: #{_lambda_.1} parent=11 // pred_check
          %p410 = pneg %p279
        $region54: #{_lambda_.1} parent=11 // pred_check_branch
          %412 = sbr.rel (%p410) target = $region56
        $region55: #{_lambda_.1} parent=11 // pred_region
          _
        $region56: #{_lambda_.1} parent=11 // pred_fallthru
          _
      $region12: #{_lambda_.1} parent=5 // pred_fallthru
        _
      %p413 = scmp.lt.s32.totalorder %s22, 2
      // Predicated region
      $region57: #{_lambda_.1} parent=5 // pred_check
        %p414 = pneg %p413
      $region58: #{_lambda_.1} parent=5 // pred_check_branch
        %416 = sbr.rel (%p414) target = $region60
      $region59: #{_lambda_.1} parent=5 // pred_region
        // Predicated region
        $region61: #{_lambda_.1} parent=59 // pred_check
          %p417 = pneg %p42
        $region62: #{_lambda_.1} parent=59 // pred_check_branch
          %419 = sbr.rel (%p417) target = $region64
        $region63: #{_lambda_.1} parent=59 // pred_region
          %p420 = scmp.lt.s32.totalorder %s22, 1
          %s421 = scalar_select %p420, %s22, 1
          %s422 = smul.addr %s421, 8
          %s423 = smul.addr %s422, 8
          %s424 = scalar_lea.vmem %s0, %s423
        $region64: #{_lambda_.1} parent=59 // pred_fallthru
          _
      $region60: #{_lambda_.1} parent=5 // pred_fallthru
        _
      %p425 = scmp.le.s32.totalorder 1, %s22
      %p426 = scmp.lt.s32.totalorder %s22, 3
      %p427 = pnand %p425, %p426
      %p428 = pneg %p427
      // Predicated region
      $region65: #{_lambda_.1} parent=5 // pred_check
        _
      $region66: #{_lambda_.1} parent=5 // pred_check_branch
        %430 = sbr.rel (%p427) target = $region68
      $region67: #{_lambda_.1} parent=5 // pred_region
        %s431 = ssub.s32 %s22, 1
        // Predicated region
        $region69: #{_lambda_.1} parent=67 // pred_check
          %p432 = pneg %p69
        $region70: #{_lambda_.1} parent=67 // pred_check_branch
          %434 = sbr.rel (%p432) target = $region72
        $region71: #{_lambda_.1} parent=67 // pred_region
          %435 = dma.done [#allocation7], 2048
        $region72: #{_lambda_.1} parent=67 // pred_fallthru
          _
        // Predicated region
        $region73: #{_lambda_.1} parent=67 // pred_check
          %p436 = pneg %p90
        $region74: #{_lambda_.1} parent=67 // pred_check_branch
          %438 = sbr.rel (%p436) target = $region76
        $region75: #{_lambda_.1} parent=67 // pred_region
          %439 = dma.done [#allocation9], 4096
        $region76: #{_lambda_.1} parent=67 // pred_fallthru
          _
        // Predicated region
        $region77: #{_lambda_.1} parent=67 // pred_check
          %p440 = pneg %p132
        $region78: #{_lambda_.1} parent=67 // pred_check_branch
          %442 = sbr.rel (%p440) target = $region80
        $region79: #{_lambda_.1} parent=67 // pred_region
          %443 = dma.done [#allocation9], 2048
        $region80: #{_lambda_.1} parent=67 // pred_fallthru
          _
        // Predicated region
        $region81: #{_lambda_.1} parent=67 // pred_check
          %p444 = pneg %p174
        $region82: #{_lambda_.1} parent=67 // pred_check_branch
          %446 = sbr.rel (%p444) target = $region84
        $region83: #{_lambda_.1} parent=67 // pred_region
          %447 = dma.done [#allocation12], 2048
        $region84: #{_lambda_.1} parent=67 // pred_fallthru
          _
        // Predicated region
        $region85: #{_lambda_.1} parent=67 // pred_check
          %p448 = pneg %p216
        $region86: #{_lambda_.1} parent=67 // pred_check_branch
          %450 = sbr.rel (%p448) target = $region88
        $region87: #{_lambda_.1} parent=67 // pred_region
          %451 = dma.done [#allocation12], 2048
        $region88: #{_lambda_.1} parent=67 // pred_fallthru
          _
        // Predicated region
        $region89: #{_lambda_.1} parent=67 // pred_check
          %p452 = pneg %p258
        $region90: #{_lambda_.1} parent=67 // pred_check_branch
          %454 = sbr.rel (%p452) target = $region92
        $region91: #{_lambda_.1} parent=67 // pred_region
          %455 = dma.done [#allocation15], 2048
        $region92: #{_lambda_.1} parent=67 // pred_fallthru
          _
        %p456 = scmp.lt.s32.totalorder %s27, 1
        %s457 = scalar_select %p456, %s27, 1
        %s458 = smul.addr %s457, 8
        %s459 = smul.addr %s458, 8
        %s460 = scalar_lea.vmem %s0, %s459
        %p461 = pneg %p48
        %p462 = pneg %p45
        %p463 = pneg %p69
        %p464 = pneg %p66
        %p465 = pneg %p90
        %p466 = pneg %p87
        %p467 = pneg %p111
        %p468 = pneg %p108
        %p469 = pneg %p132
        %p470 = pneg %p129
        %p471 = pneg %p153
        %p472 = pneg %p150
        %p473 = pneg %p174
        %p474 = pneg %p171
        %p475 = pneg %p195
        %p476 = pneg %p192
        %p477 = pneg %p216
        %p478 = pneg %p213
        %p479 = pneg %p237
        %p480 = pneg %p234
        %p481 = pneg %p258
        %p482 = pneg %p255
        %p483 = pneg %p279
        %p484 = pneg %p276
        %p485 = pneg %p305
        %p486 = pneg %p302
        %p487 = scmp.lt.s32.totalorder %s27, 1
        %s488 = scalar_select %p487, %s27, 1
        %s489 = smul.addr %s488, 4
        %s490 = scalar_lea.vmem %s12, %s489
        %p491 = scmp.lt.s32.totalorder %s27, 1
        %s492 = scalar_select %p491, %s27, 1
        %s493 = smul.addr %s492, 8
        %s494 = smul.addr %s493, 8
        %s495 = scalar_lea.vmem %s0, %s494
        %p496 = scmp.lt.s32.totalorder %s27, 1
        %s497 = scalar_select %p496, %s27, 1
        %s498 = smul.addr %s497, 4
        %s499 = scalar_lea.vmem %s12, %s498
        %v500 = vld [vmem:[%s495] sm:$0xff]
        %v501 = vld [vmem:[%s495 + $0x8] sm:$0xff]
        %v502 = vld [vmem:[%s495 + $0x10] sm:$0xff]
        %v503 = vld [vmem:[%s495 + $0x18] sm:$0xff]
        %v504 = vld [vmem:[%s495 + $0x20] sm:$0xff]
        %v505 = vld [vmem:[%s495 + $0x28] sm:$0xff]
        %v506 = vld [vmem:[%s495 + $0x30] sm:$0xff]
        %v507 = vld [vmem:[%s495 + $0x38] sm:$0xff]
        %v508 = vld [vmem:[#allocation6] sm:$0xff]
        %v509 = vld [vmem:[#allocation6 + $0x8] sm:$0xff]
        %v510 = vld [vmem:[#allocation6 + $0x10] sm:$0xff]
        %v511 = vld [vmem:[#allocation6 + $0x18] sm:$0xff]
        %v512 = vld [vmem:[#allocation6 + $0x20] sm:$0xff]
        %v513 = vld [vmem:[#allocation6 + $0x28] sm:$0xff]
        %v514 = vld [vmem:[#allocation6 + $0x30] sm:$0xff]
        %v515 = vld [vmem:[#allocation6 + $0x38] sm:$0xff]
        %v516 = vld [vmem:[#allocation6 + $0x40] sm:$0xff]
        %v517 = vld [vmem:[#allocation6 + $0x48] sm:$0xff]
        %v518 = vld [vmem:[#allocation6 + $0x50] sm:$0xff]
        %v519 = vld [vmem:[#allocation6 + $0x58] sm:$0xff]
        %v520 = vld [vmem:[#allocation6 + $0x60] sm:$0xff]
        %v521 = vld [vmem:[#allocation6 + $0x68] sm:$0xff]
        %v522 = vld [vmem:[#allocation6 + $0x70] sm:$0xff]
        %v523 = vld [vmem:[#allocation6 + $0x78] sm:$0xff]
        %v524 = vld [vmem:[%s11] sm:$0x1]
        %v525 = vlaneseq
        %v526 = vshrl.u32 %v525, 7
        %v527 = vsub.s32 0, %v526
        %v528 = vrot.slane %v524, %v527
        %529 = vmatprep.subr.mxu0 0.0
        %530 = vmatpush1.msra.mxu0 %v508
        %531 = vmatprep.subr.mxu0 0.0
        %532 = vmatpush1.msra.mxu0 %v509
        %533 = vmatprep.subr.mxu0 0.0
        %534 = vmatpush1.msra.mxu0 %v510
        %535 = vmatprep.subr.mxu0 0.0
        %536 = vmatpush1.msra.mxu0 %v511
        %537 = vmatprep.subr.mxu0 0.0
        %538 = vmatpush1.msra.mxu0 %v512
        %539 = vmatprep.subr.mxu0 0.0
        %540 = vmatpush1.msra.mxu0 %v513
        %541 = vmatprep.subr.mxu0 0.0
        %542 = vmatpush1.msra.mxu0 %v514
        %543 = vmatprep.subr.mxu0 0.0
        %544 = vmatpush1.msra.mxu0 %v515
        %545 = vmatprep.subr.mxu0 0.0
        %546 = vmatpush1.msra.mxu0 %v516
        %547 = vmatprep.subr.mxu0 0.0
        %548 = vmatpush1.msra.mxu0 %v517
        %549 = vmatprep.subr.mxu0 0.0
        %550 = vmatpush1.msra.mxu0 %v518
        %551 = vmatprep.subr.mxu0 0.0
        %552 = vmatpush1.msra.mxu0 %v519
        %553 = vmatprep.subr.mxu0 0.0
        %554 = vmatpush1.msra.mxu0 %v520
        %555 = vmatprep.subr.mxu0 0.0
        %556 = vmatpush1.msra.mxu0 %v521
        %557 = vmatprep.subr.mxu0 0.0
        %558 = vmatpush1.msra.mxu0 %v522
        %559 = vmatprep.subr.mxu0 0.0
        %560 = vmatpush1.msra.mxu0 %v523
        %561 = vmatprep.subr.mxu0 0.0
        %562 = vmatpush1.msra.mxu0 0.0
        %563 = vmatprep.subr.mxu0 0.0
        %564 = vmatpush1.msra.mxu0 0.0
        %565 = vmatprep.subr.mxu0 0.0
        %566 = vmatpush1.msra.mxu0 0.0
        %567 = vmatprep.subr.mxu0 0.0
        %568 = vmatpush1.msra.mxu0 0.0
        %569 = vmatprep.subr.mxu0 0.0
        %570 = vmatpush1.msra.mxu0 0.0
        %571 = vmatprep.subr.mxu0 0.0
        %572 = vmatpush1.msra.mxu0 0.0
        %573 = vmatprep.subr.mxu0 0.0
        %574 = vmatpush1.msra.mxu0 0.0
        %575 = vmatprep.subr.mxu0 0.0
        %576 = vmatpush1.msra.mxu0 0.0
        %577 = vmatprep.subr.mxu0 0.0
        %578 = vmatpush1.msra.mxu0 0.0
        %579 = vmatprep.subr.mxu0 0.0
        %580 = vmatpush1.msra.mxu0 0.0
        %581 = vmatprep.subr.mxu0 0.0
        %582 = vmatpush1.msra.mxu0 0.0
        %583 = vmatprep.subr.mxu0 0.0
        %584 = vmatpush1.msra.mxu0 0.0
        %585 = vmatprep.subr.mxu0 0.0
        %586 = vmatpush1.msra.mxu0 0.0
        %587 = vmatprep.subr.mxu0 0.0
        %588 = vmatpush1.msra.mxu0 0.0
        %589 = vmatprep.subr.mxu0 0.0
        %590 = vmatpush1.msra.mxu0 0.0
        %591 = vmatprep.subr.mxu0 0.0
        %592 = vmatpush1.msra.mxu0 0.0
        %593 = vmatprep.mubr.f32.mxu0 0.0
        %594 = vmatmul.mubr.f32.gmra.mrb[0].mxu0 %v500
        %v595 = vpop.f32.mrb[0].mxu0
        %v596 = vadd.f32 %v528, %v595
        %v597 = vpop.f32.mrb[0].mxu0
        %598 = vmatprep.mubr.f32.mxu0 0.0
        %599 = vmatmul.mubr.f32.gmra.mrb[0].mxu0 %v501
        %v600 = vpop.f32.mrb[0].mxu0
        %v601 = vadd.f32 %v528, %v600
        %v602 = vpop.f32.mrb[0].mxu0
        %603 = vmatprep.mubr.f32.mxu0 0.0
        %604 = vmatmul.mubr.f32.gmra.mrb[0].mxu0 %v502
        %v605 = vpop.f32.mrb[0].mxu0
        %v606 = vadd.f32 %v528, %v605
        %v607 = vpop.f32.mrb[0].mxu0
        %608 = vmatprep.mubr.f32.mxu0 0.0
        %609 = vmatmul.mubr.f32.gmra.mrb[0].mxu0 %v503
        %v610 = vpop.f32.mrb[0].mxu0
        %v611 = vadd.f32 %v528, %v610
        %v612 = vpop.f32.mrb[0].mxu0
        %613 = vmatprep.mubr.f32.mxu0 0.0
        %614 = vmatmul.mubr.f32.gmra.mrb[0].mxu0 %v504
        %v615 = vpop.f32.mrb[0].mxu0
        %v616 = vadd.f32 %v528, %v615
        %v617 = vpop.f32.mrb[0].mxu0
        %618 = vmatprep.mubr.f32.mxu0 0.0
        %619 = vmatmul.mubr.f32.gmra.mrb[0].mxu0 %v505
        %v620 = vpop.f32.mrb[0].mxu0
        %v621 = vadd.f32 %v528, %v620
        %v622 = vpop.f32.mrb[0].mxu0
        %623 = vmatprep.mubr.f32.mxu0 0.0
        %624 = vmatmul.mubr.f32.gmra.mrb[0].mxu0 %v506
        %v625 = vpop.f32.mrb[0].mxu0
        %v626 = vadd.f32 %v528, %v625
        %v627 = vpop.f32.mrb[0].mxu0
        %628 = vmatprep.mubr.f32.mxu0 0.0
        %629 = vmatmul.mubr.f32.gmra.mrb[0].mxu0 %v507
        %v630 = vpop.f32.mrb[0].mxu0
        %v631 = vadd.f32 %v528, %v630
        %v632 = vpop.f32.mrb[0].mxu0
        %633 = vdwg.mxu0
        %v634 = vsub.f32 0.0, %v596
        %v635 = vsub.f32 0.0, %v601
        %v636 = vsub.f32 0.0, %v606
        %v637 = vsub.f32 0.0, %v611
        %v638 = vsub.f32 0.0, %v616
        %v639 = vsub.f32 0.0, %v621
        %v640 = vsub.f32 0.0, %v626
        %v641 = vsub.f32 0.0, %v631
        %v642 = vmul.f32 %v634, 1.442695
        %v643 = vpow.pop %v642
        %v644 = vmul.f32 %v635, 1.442695
        %v645 = vpow.pop %v644
        %v646 = vmul.f32 %v636, 1.442695
        %v647 = vpow.pop %v646
        %v648 = vmul.f32 %v637, 1.442695
        %v649 = vpow.pop %v648
        %v650 = vmul.f32 %v638, 1.442695
        %v651 = vpow.pop %v650
        %v652 = vmul.f32 %v639, 1.442695
        %v653 = vpow.pop %v652
        %v654 = vmul.f32 %v640, 1.442695
        %v655 = vpow.pop %v654
        %v656 = vmul.f32 %v641, 1.442695
        %v657 = vpow.pop %v656
        %v658 = vadd.f32 %v643, 1.0
        %v659 = vadd.f32 %v645, 1.0
        %v660 = vadd.f32 %v647, 1.0
        %v661 = vadd.f32 %v649, 1.0
        %v662 = vadd.f32 %v651, 1.0
        %v663 = vadd.f32 %v653, 1.0
        %v664 = vadd.f32 %v655, 1.0
        %v665 = vadd.f32 %v657, 1.0
        %v666 = vrcp.pop %v658
        %v667 = vrcp.pop %v659
        %v668 = vrcp.pop %v660
        %v669 = vrcp.pop %v661
        %v670 = vrcp.pop %v662
        %v671 = vrcp.pop %v663
        %v672 = vrcp.pop %v664
        %v673 = vrcp.pop %v665
        %v674 = vmul.f32 %v596, %v666
        %v675 = vmul.f32 %v601, %v667
        %v676 = vmul.f32 %v606, %v668
        %v677 = vmul.f32 %v611, %v669
        %v678 = vmul.f32 %v616, %v670
        %v679 = vmul.f32 %v621, %v671
        %v680 = vmul.f32 %v626, %v672
        %v681 = vmul.f32 %v631, %v673
        %682 = vst [vmem:[#allocation2] sm:$0xff] 0.0
        %683 = vst [vmem:[#allocation2 + $0x28] sm:$0xff] 0.0
        %684 = vst [vmem:[#allocation2 + $0x50] sm:$0xff] 0.0
        %685 = vst [vmem:[#allocation2 + $0x8] sm:$0xff] %v674
        %686 = vst [vmem:[#allocation2 + $0x10] sm:$0xff] %v675
        %687 = vst [vmem:[#allocation2 + $0x18] sm:$0xff] %v676
        %688 = vst [vmem:[#allocation2 + $0x20] sm:$0xff] %v677
        %689 = vst [vmem:[#allocation2 + $0x30] sm:$0xff] %v678
        %690 = vst [vmem:[#allocation2 + $0x38] sm:$0xff] %v679
        %691 = vst [vmem:[#allocation2 + $0x40] sm:$0xff] %v680
        %692 = vst [vmem:[#allocation2 + $0x48] sm:$0xff] %v681
        %v693 = vld [vmem:[#allocation2 + $0x7] sm:$0xff]
        %v694 = vld [vmem:[#allocation2 + $0xf] sm:$0xff]
        %v695 = vld [vmem:[#allocation2 + $0x17] sm:$0xff]
        %v696 = vld [vmem:[#allocation2 + $0x1f] sm:$0xff]
        %v697 = vld [vmem:[#allocation2 + $0x2f] sm:$0xff]
        %v698 = vld [vmem:[#allocation2 + $0x37] sm:$0xff]
        %v699 = vld [vmem:[#allocation2 + $0x3f] sm:$0xff]
        %v700 = vld [vmem:[#allocation2 + $0x47] sm:$0xff]
        %v701 = vld [vmem:[#allocation8] sm:$0xff]
        %v702 = vld [vmem:[#allocation8 + $0x8] sm:$0xff]
        %v703 = vld [vmem:[#allocation8 + $0x10] sm:$0xff]
        %v704 = vld [vmem:[#allocation8 + $0x18] sm:$0xff]
        %v705 = vld [vmem:[#allocation8 + $0x20] sm:$0xff]
        %v706 = vld [vmem:[#allocation8 + $0x28] sm:$0xff]
        %v707 = vld [vmem:[#allocation8 + $0x30] sm:$0xff]
        %v708 = vld [vmem:[#allocation8 + $0x38] sm:$0xff]
        %v709 = vld [vmem:[#allocation8 + $0x40] sm:$0xff]
        %v710 = vld [vmem:[#allocation8 + $0x48] sm:$0xff]
        %v711 = vld [vmem:[#allocation8 + $0x50] sm:$0xff]
        %v712 = vld [vmem:[#allocation8 + $0x58] sm:$0xff]
        %v713 = vld [vmem:[#allocation8 + $0x60] sm:$0xff]
        %v714 = vld [vmem:[#allocation8 + $0x68] sm:$0xff]
        %v715 = vld [vmem:[#allocation8 + $0x70] sm:$0xff]
        %v716 = vld [vmem:[#allocation8 + $0x78] sm:$0xff]
        %v717 = vld [vmem:[#allocation8 + $0x80] sm:$0xff]
        %v718 = vld [vmem:[#allocation8 + $0x88] sm:$0xff]
        %v719 = vld [vmem:[#allocation8 + $0x90] sm:$0xff]
        %v720 = vld [vmem:[#allocation8 + $0x98] sm:$0xff]
        %v721 = vld [vmem:[#allocation8 + $0xa0] sm:$0xff]
        %v722 = vld [vmem:[#allocation8 + $0xa8] sm:$0xff]
        %v723 = vld [vmem:[#allocation8 + $0xb0] sm:$0xff]
        %v724 = vld [vmem:[#allocation8 + $0xb8] sm:$0xff]
        %v725 = vld [vmem:[#allocation8 + $0xc0] sm:$0xff]
        %v726 = vld [vmem:[#allocation8 + $0xc8] sm:$0xff]
        %v727 = vld [vmem:[#allocation8 + $0xd0] sm:$0xff]
        %v728 = vld [vmem:[#allocation8 + $0xd8] sm:$0xff]
        %v729 = vld [vmem:[#allocation8 + $0xe0] sm:$0xff]
        %v730 = vld [vmem:[#allocation8 + $0xe8] sm:$0xff]
        %v731 = vld [vmem:[#allocation8 + $0xf0] sm:$0xff]
        %v732 = vld [vmem:[#allocation8 + $0xf8] sm:$0xff]
        %v733 = vld [vmem:[#allocation2 + $0x8] sm:$0xff]
        %v734 = vld [vmem:[#allocation2 + $0x10] sm:$0xff]
        %v735 = vld [vmem:[#allocation2 + $0x18] sm:$0xff]
        %v736 = vld [vmem:[#allocation2 + $0x20] sm:$0xff]
        %v737 = vld [vmem:[#allocation2 + $0x30] sm:$0xff]
        %v738 = vld [vmem:[#allocation2 + $0x38] sm:$0xff]
        %v739 = vld [vmem:[#allocation2 + $0x40] sm:$0xff]
        %v740 = vld [vmem:[#allocation2 + $0x48] sm:$0xff]
        %v741 = vld [vmem:[%s3] sm:$0xff]
        %v742 = vld [vmem:[%s3 + $0x8] sm:$0xff]
        %v743 = vld [vmem:[%s3 + $0x10] sm:$0xff]
        %v744 = vld [vmem:[%s3 + $0x18] sm:$0xff]
        %v745 = vld [vmem:[%s3 + $0x20] sm:$0xff]
        %v746 = vld [vmem:[%s3 + $0x28] sm:$0xff]
        %v747 = vld [vmem:[%s3 + $0x30] sm:$0xff]
        %v748 = vld [vmem:[%s3 + $0x38] sm:$0xff]
        %v749 = vld [vmem:[%s3 + $0x40] sm:$0xff]
        %v750 = vld [vmem:[%s3 + $0x48] sm:$0xff]
        %v751 = vld [vmem:[%s3 + $0x50] sm:$0xff]
        %v752 = vld [vmem:[%s3 + $0x58] sm:$0xff]
        %v753 = vld [vmem:[%s3 + $0x60] sm:$0xff]
        %v754 = vld [vmem:[%s3 + $0x68] sm:$0xff]
        %v755 = vld [vmem:[%s3 + $0x70] sm:$0xff]
        %v756 = vld [vmem:[%s3 + $0x78] sm:$0xff]
        %v757 = vld [vmem:[%s3 + $0x80] sm:$0xff]
        %v758 = vld [vmem:[%s3 + $0x88] sm:$0xff]
        %v759 = vld [vmem:[%s3 + $0x90] sm:$0xff]
        %v760 = vld [vmem:[%s3 + $0x98] sm:$0xff]
        %v761 = vld [vmem:[%s3 + $0xa0] sm:$0xff]
        %v762 = vld [vmem:[%s3 + $0xa8] sm:$0xff]
        %v763 = vld [vmem:[%s3 + $0xb0] sm:$0xff]
        %v764 = vld [vmem:[%s3 + $0xb8] sm:$0xff]
        %v765 = vld [vmem:[%s3 + $0xc0] sm:$0xff]
        %v766 = vld [vmem:[%s3 + $0xc8] sm:$0xff]
        %v767 = vld [vmem:[%s3 + $0xd0] sm:$0xff]
        %v768 = vld [vmem:[%s3 + $0xd8] sm:$0xff]
        %v769 = vld [vmem:[%s3 + $0xe0] sm:$0xff]
        %v770 = vld [vmem:[%s3 + $0xe8] sm:$0xff]
        %v771 = vld [vmem:[%s3 + $0xf0] sm:$0xff]
        %v772 = vld [vmem:[%s3 + $0xf8] sm:$0xff]
        %773 = vmatprep.subr.mxu0 0.0
        %774 = vmatpush1.msra.mxu0 %v741
        %775 = vmatprep.subr.mxu0 0.0
        %776 = vmatpush1.msra.mxu0 %v742
        %777 = vmatprep.subr.mxu0 0.0
        %778 = vmatpush1.msra.mxu0 %v743
        %779 = vmatprep.subr.mxu0 0.0
        %780 = vmatpush1.msra.mxu0 %v744
        %781 = vmatprep.subr.mxu0 0.0
        %782 = vmatpush1.msra.mxu0 %v745
        %783 = vmatprep.subr.mxu0 0.0
        %784 = vmatpush1.msra.mxu0 %v746
        %785 = vmatprep.subr.mxu0 0.0
        %786 = vmatpush1.msra.mxu0 %v747
        %787 = vmatprep.subr.mxu0 0.0
        %788 = vmatpush1.msra.mxu0 %v748
        %789 = vmatprep.subr.mxu0 0.0
        %790 = vmatpush1.msra.mxu0 %v749
        %791 = vmatprep.subr.mxu0 0.0
        %792 = vmatpush1.msra.mxu0 %v750
        %793 = vmatprep.subr.mxu0 0.0
        %794 = vmatpush1.msra.mxu0 %v751
        %795 = vmatprep.subr.mxu0 0.0
        %796 = vmatpush1.msra.mxu0 %v752
        %797 = vmatprep.subr.mxu0 0.0
        %798 = vmatpush1.msra.mxu0 %v753
        %799 = vmatprep.subr.mxu0 0.0
        %800 = vmatpush1.msra.mxu0 %v754
        %801 = vmatprep.subr.mxu0 0.0
        %802 = vmatpush1.msra.mxu0 %v755
        %803 = vmatprep.subr.mxu0 0.0
        %804 = vmatpush1.msra.mxu0 %v756
        %805 = vmatprep.subr.mxu0 0.0
        %806 = vmatpush1.msra.mxu0 %v757
        %807 = vmatprep.subr.mxu0 0.0
        %808 = vmatpush1.msra.mxu0 %v758
        %809 = vmatprep.subr.mxu0 0.0
        %810 = vmatpush1.msra.mxu0 %v759
        %811 = vmatprep.subr.mxu0 0.0
        %812 = vmatpush1.msra.mxu0 %v760
        %813 = vmatprep.subr.mxu0 0.0
        %814 = vmatpush1.msra.mxu0 %v761
        %815 = vmatprep.subr.mxu0 0.0
        %816 = vmatpush1.msra.mxu0 %v762
        %817 = vmatprep.subr.mxu0 0.0
        %818 = vmatpush1.msra.mxu0 %v763
        %819 = vmatprep.subr.mxu0 0.0
        %820 = vmatpush1.msra.mxu0 %v764
        %821 = vmatprep.subr.mxu0 0.0
        %822 = vmatpush1.msra.mxu0 %v765
        %823 = vmatprep.subr.mxu0 0.0
        %824 = vmatpush1.msra.mxu0 %v766
        %825 = vmatprep.subr.mxu0 0.0
        %826 = vmatpush1.msra.mxu0 %v767
        %827 = vmatprep.subr.mxu0 0.0
        %828 = vmatpush1.msra.mxu0 %v768
        %829 = vmatprep.subr.mxu0 0.0
        %830 = vmatpush1.msra.mxu0 %v769
        %831 = vmatprep.subr.mxu0 0.0
        %832 = vmatpush1.msra.mxu0 %v770
        %833 = vmatprep.subr.mxu0 0.0
        %834 = vmatpush1.msra.mxu0 %v771
        %835 = vmatprep.subr.mxu0 0.0
        %836 = vmatpush1.msra.mxu0 %v772
        %837 = vmatprep.mubr.f32.mxu0 %v737
        %838 = vmatmul.mubr.f32.gmra.mrb[0].mxu0 %v733
        %v839 = vpop.f32.mrb[0].mxu0
        %v840 = vadd.f32 0.0, %v839
        %v841 = vpop.f32.mrb[0].mxu0
        %842 = vmatprep.mubr.f32.mxu0 %v738
        %843 = vmatmul.mubr.f32.gmra.mrb[0].mxu0 %v734
        %v844 = vpop.f32.mrb[0].mxu0
        %v845 = vadd.f32 0.0, %v844
        %v846 = vpop.f32.mrb[0].mxu0
        %847 = vmatprep.mubr.f32.mxu0 %v739
        %848 = vmatmul.mubr.f32.gmra.mrb[0].mxu0 %v735
        %v849 = vpop.f32.mrb[0].mxu0
        %v850 = vadd.f32 0.0, %v849
        %v851 = vpop.f32.mrb[0].mxu0
        %852 = vmatprep.mubr.f32.mxu0 %v740
        %853 = vmatmul.mubr.f32.gmra.mrb[0].mxu0 %v736
        %v854 = vpop.f32.mrb[0].mxu0
        %v855 = vadd.f32 0.0, %v854
        %v856 = vpop.f32.mrb[0].mxu0
        %857 = vdwg.mxu0
        %858 = vmatprep.subr.mxu0 0.0
        %859 = vmatpush1.msra.mxu0 %v701
        %860 = vmatprep.subr.mxu0 0.0
        %861 = vmatpush1.msra.mxu0 %v702
        %862 = vmatprep.subr.mxu0 0.0
        %863 = vmatpush1.msra.mxu0 %v703
        %864 = vmatprep.subr.mxu0 0.0
        %865 = vmatpush1.msra.mxu0 %v704
        %866 = vmatprep.subr.mxu0 0.0
        %867 = vmatpush1.msra.mxu0 %v705
        %868 = vmatprep.subr.mxu0 0.0
        %869 = vmatpush1.msra.mxu0 %v706
        %870 = vmatprep.subr.mxu0 0.0
        %871 = vmatpush1.msra.mxu0 %v707
        %872 = vmatprep.subr.mxu0 0.0
        %873 = vmatpush1.msra.mxu0 %v708
        %874 = vmatprep.subr.mxu0 0.0
        %875 = vmatpush1.msra.mxu0 %v709
        %876 = vmatprep.subr.mxu0 0.0
        %877 = vmatpush1.msra.mxu0 %v710
        %878 = vmatprep.subr.mxu0 0.0
        %879 = vmatpush1.msra.mxu0 %v711
        %880 = vmatprep.subr.mxu0 0.0
        %881 = vmatpush1.msra.mxu0 %v712
        %882 = vmatprep.subr.mxu0 0.0
        %883 = vmatpush1.msra.mxu0 %v713
        %884 = vmatprep.subr.mxu0 0.0
        %885 = vmatpush1.msra.mxu0 %v714
        %886 = vmatprep.subr.mxu0 0.0
        %887 = vmatpush1.msra.mxu0 %v715
        %888 = vmatprep.subr.mxu0 0.0
        %889 = vmatpush1.msra.mxu0 %v716
        %890 = vmatprep.subr.mxu0 0.0
        %891 = vmatpush1.msra.mxu0 %v717
        %892 = vmatprep.subr.mxu0 0.0
        %893 = vmatpush1.msra.mxu0 %v718
        %894 = vmatprep.subr.mxu0 0.0
        %895 = vmatpush1.msra.mxu0 %v719
        %896 = vmatprep.subr.mxu0 0.0
        %897 = vmatpush1.msra.mxu0 %v720
        %898 = vmatprep.subr.mxu0 0.0
        %899 = vmatpush1.msra.mxu0 %v721
        %900 = vmatprep.subr.mxu0 0.0
        %901 = vmatpush1.msra.mxu0 %v722
        %902 = vmatprep.subr.mxu0 0.0
        %903 = vmatpush1.msra.mxu0 %v723
        %904 = vmatprep.subr.mxu0 0.0
        %905 = vmatpush1.msra.mxu0 %v724
        %906 = vmatprep.subr.mxu0 0.0
        %907 = vmatpush1.msra.mxu0 %v725
        %908 = vmatprep.subr.mxu0 0.0
        %909 = vmatpush1.msra.mxu0 %v726
        %910 = vmatprep.subr.mxu0 0.0
        %911 = vmatpush1.msra.mxu0 %v727
        %912 = vmatprep.subr.mxu0 0.0
        %913 = vmatpush1.msra.mxu0 %v728
        %914 = vmatprep.subr.mxu0 0.0
        %915 = vmatpush1.msra.mxu0 %v729
        %916 = vmatprep.subr.mxu0 0.0
        %917 = vmatpush1.msra.mxu0 %v730
        %918 = vmatprep.subr.mxu0 0.0
        %919 = vmatpush1.msra.mxu0 %v731
        %920 = vmatprep.subr.mxu0 0.0
        %921 = vmatpush1.msra.mxu0 %v732
        %922 = vmatprep.mubr.f32.mxu0 %v697
        %923 = vmatmul.mubr.f32.gmra.mrb[0].mxu0 %v693
        %v924 = vpop.f32.mrb[0].mxu0
        %v925 = vadd.f32 %v840, %v924
        %v926 = vpop.f32.mrb[0].mxu0
        %927 = vmatprep.mubr.f32.mxu0 %v698
        %928 = vmatmul.mubr.f32.gmra.mrb[0].mxu0 %v694
        %v929 = vpop.f32.mrb[0].mxu0
        %v930 = vadd.f32 %v845, %v929
        %v931 = vpop.f32.mrb[0].mxu0
        %932 = vmatprep.mubr.f32.mxu0 %v699
        %933 = vmatmul.mubr.f32.gmra.mrb[0].mxu0 %v695
        %v934 = vpop.f32.mrb[0].mxu0
        %v935 = vadd.f32 %v850, %v934
        %v936 = vpop.f32.mrb[0].mxu0
        %937 = vmatprep.mubr.f32.mxu0 %v700
        %938 = vmatmul.mubr.f32.gmra.mrb[0].mxu0 %v696
        %v939 = vpop.f32.mrb[0].mxu0
        %v940 = vadd.f32 %v855, %v939
        %v941 = vpop.f32.mrb[0].mxu0
        %942 = vdwg.mxu0
        %v943 = vld [vmem:[#allocation2 + $0x9] sm:$0xff]
        %v944 = vld [vmem:[#allocation2 + $0x11] sm:$0xff]
        %v945 = vld [vmem:[#allocation2 + $0x19] sm:$0xff]
        %v946 = vld [vmem:[#allocation2 + $0x21] sm:$0xff]
        %v947 = vld [vmem:[#allocation10] sm:$0xff]
        %v948 = vld [vmem:[#allocation10 + $0x8] sm:$0xff]
        %v949 = vld [vmem:[#allocation10 + $0x10] sm:$0xff]
        %v950 = vld [vmem:[#allocation10 + $0x18] sm:$0xff]
        %v951 = vld [vmem:[#allocation10 + $0x20] sm:$0xff]
        %v952 = vld [vmem:[#allocation10 + $0x28] sm:$0xff]
        %v953 = vld [vmem:[#allocation10 + $0x30] sm:$0xff]
        %v954 = vld [vmem:[#allocation10 + $0x38] sm:$0xff]
        %v955 = vld [vmem:[#allocation10 + $0x40] sm:$0xff]
        %v956 = vld [vmem:[#allocation10 + $0x48] sm:$0xff]
        %v957 = vld [vmem:[#allocation10 + $0x50] sm:$0xff]
        %v958 = vld [vmem:[#allocation10 + $0x58] sm:$0xff]
        %v959 = vld [vmem:[#allocation10 + $0x60] sm:$0xff]
        %v960 = vld [vmem:[#allocation10 + $0x68] sm:$0xff]
        %v961 = vld [vmem:[#allocation10 + $0x70] sm:$0xff]
        %v962 = vld [vmem:[#allocation10 + $0x78] sm:$0xff]
        %963 = vmatprep.subr.mxu0 0.0
        %964 = vmatpush1.msra.mxu0 %v947
        %965 = vmatprep.subr.mxu0 0.0
        %966 = vmatpush1.msra.mxu0 %v948
        %967 = vmatprep.subr.mxu0 0.0
        %968 = vmatpush1.msra.mxu0 %v949
        %969 = vmatprep.subr.mxu0 0.0
        %970 = vmatpush1.msra.mxu0 %v950
        %971 = vmatprep.subr.mxu0 0.0
        %972 = vmatpush1.msra.mxu0 %v951
        %973 = vmatprep.subr.mxu0 0.0
        %974 = vmatpush1.msra.mxu0 %v952
        %975 = vmatprep.subr.mxu0 0.0
        %976 = vmatpush1.msra.mxu0 %v953
        %977 = vmatprep.subr.mxu0 0.0
        %978 = vmatpush1.msra.mxu0 %v954
        %979 = vmatprep.subr.mxu0 0.0
        %980 = vmatpush1.msra.mxu0 %v955
        %981 = vmatprep.subr.mxu0 0.0
        %982 = vmatpush1.msra.mxu0 %v956
        %983 = vmatprep.subr.mxu0 0.0
        %984 = vmatpush1.msra.mxu0 %v957
        %985 = vmatprep.subr.mxu0 0.0
        %986 = vmatpush1.msra.mxu0 %v958
        %987 = vmatprep.subr.mxu0 0.0
        %988 = vmatpush1.msra.mxu0 %v959
        %989 = vmatprep.subr.mxu0 0.0
        %990 = vmatpush1.msra.mxu0 %v960
        %991 = vmatprep.subr.mxu0 0.0
        %992 = vmatpush1.msra.mxu0 %v961
        %993 = vmatprep.subr.mxu0 0.0
        %994 = vmatpush1.msra.mxu0 %v962
        %995 = vmatprep.subr.mxu0 0.0
        %996 = vmatpush1.msra.mxu0 0.0
        %997 = vmatprep.subr.mxu0 0.0
        %998 = vmatpush1.msra.mxu0 0.0
        %999 = vmatprep.subr.mxu0 0.0
        %1000 = vmatpush1.msra.mxu0 0.0
        %1001 = vmatprep.subr.mxu0 0.0
        %1002 = vmatpush1.msra.mxu0 0.0
        %1003 = vmatprep.subr.mxu0 0.0
        %1004 = vmatpush1.msra.mxu0 0.0
        %1005 = vmatprep.subr.mxu0 0.0
        %1006 = vmatpush1.msra.mxu0 0.0
        %1007 = vmatprep.subr.mxu0 0.0
        %1008 = vmatpush1.msra.mxu0 0.0
        %1009 = vmatprep.subr.mxu0 0.0
        %1010 = vmatpush1.msra.mxu0 0.0
        %1011 = vmatprep.subr.mxu0 0.0
        %1012 = vmatpush1.msra.mxu0 0.0
        %1013 = vmatprep.subr.mxu0 0.0
        %1014 = vmatpush1.msra.mxu0 0.0
        %1015 = vmatprep.subr.mxu0 0.0
        %1016 = vmatpush1.msra.mxu0 0.0
        %1017 = vmatprep.subr.mxu0 0.0
        %1018 = vmatpush1.msra.mxu0 0.0
        %1019 = vmatprep.subr.mxu0 0.0
        %1020 = vmatpush1.msra.mxu0 0.0
        %1021 = vmatprep.subr.mxu0 0.0
        %1022 = vmatpush1.msra.mxu0 0.0
        %1023 = vmatprep.subr.mxu0 0.0
        %1024 = vmatpush1.msra.mxu0 0.0
        %1025 = vmatprep.subr.mxu0 0.0
        %1026 = vmatpush1.msra.mxu0 0.0
        %1027 = vmatprep.mubr.f32.mxu0 0.0
        %1028 = vmatmul.mubr.f32.gmra.mrb[0].mxu0 %v943
        %v1029 = vpop.f32.mrb[0].mxu0
        %v1030 = vadd.f32 0.0, %v1029
        %v1031 = vpop.f32.mrb[0].mxu0
        %1032 = vmatprep.mubr.f32.mxu0 0.0
        %1033 = vmatmul.mubr.f32.gmra.mrb[0].mxu0 %v944
        %v1034 = vpop.f32.mrb[0].mxu0
        %v1035 = vadd.f32 0.0, %v1034
        %v1036 = vpop.f32.mrb[0].mxu0
        %1037 = vmatprep.mubr.f32.mxu0 0.0
        %1038 = vmatmul.mubr.f32.gmra.mrb[0].mxu0 %v945
        %v1039 = vpop.f32.mrb[0].mxu0
        %v1040 = vadd.f32 0.0, %v1039
        %v1041 = vpop.f32.mrb[0].mxu0
        %1042 = vmatprep.mubr.f32.mxu0 0.0
        %1043 = vmatmul.mubr.f32.gmra.mrb[0].mxu0 %v946
        %v1044 = vpop.f32.mrb[0].mxu0
        %v1045 = vadd.f32 0.0, %v1044
        %v1046 = vpop.f32.mrb[0].mxu0
        %1047 = vdwg.mxu0
        %v1048 = vadd.f32 %v925, %v1030
        %v1049 = vadd.f32 %v930, %v1035
        %v1050 = vadd.f32 %v935, %v1040
        %v1051 = vadd.f32 %v940, %v1045
        %v1052 = vld [vmem:[%s11 + $0x1] sm:$0x1]
        %v1053 = vlaneseq
        %v1054 = vshrl.u32 %v1053, 7
        %v1055 = vsub.s32 0, %v1054
        %v1056 = vrot.slane %v1052, %v1055
        %v1057 = vadd.f32 %v1048, %v1056
        %v1058 = vadd.f32 %v1049, %v1056
        %v1059 = vadd.f32 %v1050, %v1056
        %v1060 = vadd.f32 %v1051, %v1056
        %v1061 = vsub.f32 0.0, %v1057
        %v1062 = vsub.f32 0.0, %v1058
        %v1063 = vsub.f32 0.0, %v1059
        %v1064 = vsub.f32 0.0, %v1060
        %v1065 = vmul.f32 %v1061, 1.442695
        %v1066 = vpow.pop %v1065
        %v1067 = vmul.f32 %v1062, 1.442695
        %v1068 = vpow.pop %v1067
        %v1069 = vmul.f32 %v1063, 1.442695
        %v1070 = vpow.pop %v1069
        %v1071 = vmul.f32 %v1064, 1.442695
        %v1072 = vpow.pop %v1071
        %v1073 = vadd.f32 %v1066, 1.0
        %v1074 = vadd.f32 %v1068, 1.0
        %v1075 = vadd.f32 %v1070, 1.0
        %v1076 = vadd.f32 %v1072, 1.0
        %v1077 = vrcp.pop %v1073
        %v1078 = vrcp.pop %v1074
        %v1079 = vrcp.pop %v1075
        %v1080 = vrcp.pop %v1076
        %v1081 = vmul.f32 %v1057, %v1077
        %v1082 = vmul.f32 %v1058, %v1078
        %v1083 = vmul.f32 %v1059, %v1079
        %v1084 = vmul.f32 %v1060, %v1080
        %1085 = vst [vmem:[#allocation3] sm:$0xff] %v1081
        %1086 = vst [vmem:[#allocation3 + $0x8] sm:$0xff] %v1082
        %1087 = vst [vmem:[#allocation3 + $0x10] sm:$0xff] %v1083
        %1088 = vst [vmem:[#allocation3 + $0x18] sm:$0xff] %v1084
        %v1089 = vld [vmem:[#allocation3] ss:$2 sm:$0xff]
        %s1090 = scalar_lea.vmem [#allocation3], 16
        %v1091 = vld [vmem:[%s1090] ss:$2 sm:$0x7f]
        %s1092 = scalar_lea.vmem [#allocation3], 1
        %v1093 = vld [vmem:[%s1092] ss:$2 sm:$0xff]
        %s1094 = scalar_lea.vmem [#allocation3], 17
        %v1095 = vld [vmem:[%s1094] ss:$2 sm:$0x7f]
        %v1096 = vld [vmem:[%s5] sm:$0xff]
        %v1097 = vld [vmem:[%s5 + $0x8] sm:$0xff]
        %v1098 = vld [vmem:[%s5 + $0x10] sm:$0xff]
        %v1099 = vld [vmem:[%s5 + $0x18] sm:$0xff]
        %v1100 = vld [vmem:[%s5 + $0x20] sm:$0xff]
        %v1101 = vld [vmem:[%s5 + $0x28] sm:$0xff]
        %v1102 = vld [vmem:[%s5 + $0x30] sm:$0xff]
        %v1103 = vld [vmem:[%s5 + $0x38] sm:$0xff]
        %v1104 = vld [vmem:[%s5 + $0x40] sm:$0xff]
        %v1105 = vld [vmem:[%s5 + $0x48] sm:$0xff]
        %v1106 = vld [vmem:[%s5 + $0x50] sm:$0xff]
        %v1107 = vld [vmem:[%s5 + $0x58] sm:$0xff]
        %v1108 = vld [vmem:[%s5 + $0x60] sm:$0xff]
        %v1109 = vld [vmem:[%s5 + $0x68] sm:$0xff]
        %v1110 = vld [vmem:[%s5 + $0x70] sm:$0xff]
        %v1111 = vld [vmem:[%s5 + $0x78] sm:$0xff]
        %v1112 = vld [vmem:[%s5 + $0x80] sm:$0xff]
        %v1113 = vld [vmem:[%s5 + $0x88] sm:$0xff]
        %v1114 = vld [vmem:[%s5 + $0x90] sm:$0xff]
        %v1115 = vld [vmem:[%s5 + $0x98] sm:$0xff]
        %v1116 = vld [vmem:[%s5 + $0xa0] sm:$0xff]
        %v1117 = vld [vmem:[%s5 + $0xa8] sm:$0xff]
        %v1118 = vld [vmem:[%s5 + $0xb0] sm:$0xff]
        %v1119 = vld [vmem:[%s5 + $0xb8] sm:$0xff]
        %v1120 = vld [vmem:[%s5 + $0xc0] sm:$0xff]
        %v1121 = vld [vmem:[%s5 + $0xc8] sm:$0xff]
        %v1122 = vld [vmem:[%s5 + $0xd0] sm:$0xff]
        %v1123 = vld [vmem:[%s5 + $0xd8] sm:$0xff]
        %v1124 = vld [vmem:[%s5 + $0xe0] sm:$0xff]
        %v1125 = vld [vmem:[%s5 + $0xe8] sm:$0xff]
        %v1126 = vld [vmem:[%s5 + $0xf0] sm:$0xff]
        %v1127 = vld [vmem:[%s5 + $0xf8] sm:$0xff]
        %s1128 = scalar_lea.vmem [#allocation3], 2
        %v1129 = vld [vmem:[%s1128] ss:$2 sm:$0xff]
        %s1130 = scalar_lea.vmem [#allocation3], 18
        %v1131 = vld [vmem:[%s1130] ss:$2 sm:$0x7f]
        %v1132 = vld [vmem:[#allocation11] sm:$0xff]
        %v1133 = vld [vmem:[#allocation11 + $0x8] sm:$0xff]
        %v1134 = vld [vmem:[#allocation11 + $0x10] sm:$0xff]
        %v1135 = vld [vmem:[#allocation11 + $0x18] sm:$0xff]
        %v1136 = vld [vmem:[#allocation11 + $0x20] sm:$0xff]
        %v1137 = vld [vmem:[#allocation11 + $0x28] sm:$0xff]
        %v1138 = vld [vmem:[#allocation11 + $0x30] sm:$0xff]
        %v1139 = vld [vmem:[#allocation11 + $0x38] sm:$0xff]
        %v1140 = vld [vmem:[#allocation11 + $0x40] sm:$0xff]
        %v1141 = vld [vmem:[#allocation11 + $0x48] sm:$0xff]
        %v1142 = vld [vmem:[#allocation11 + $0x50] sm:$0xff]
        %v1143 = vld [vmem:[#allocation11 + $0x58] sm:$0xff]
        %v1144 = vld [vmem:[#allocation11 + $0x60] sm:$0xff]
        %v1145 = vld [vmem:[#allocation11 + $0x68] sm:$0xff]
        %v1146 = vld [vmem:[#allocation11 + $0x70] sm:$0xff]
        %v1147 = vld [vmem:[#allocation11 + $0x78] sm:$0xff]
        %1148 = vmatprep.subr.mxu0 0.0
        %1149 = vmatpush1.msra.mxu0 %v1132
        %1150 = vmatprep.subr.mxu0 0.0
        %1151 = vmatpush1.msra.mxu0 %v1133
        %1152 = vmatprep.subr.mxu0 0.0
        %1153 = vmatpush1.msra.mxu0 %v1134
        %1154 = vmatprep.subr.mxu0 0.0
        %1155 = vmatpush1.msra.mxu0 %v1135
        %1156 = vmatprep.subr.mxu0 0.0
        %1157 = vmatpush1.msra.mxu0 %v1136
        %1158 = vmatprep.subr.mxu0 0.0
        %1159 = vmatpush1.msra.mxu0 %v1137
        %1160 = vmatprep.subr.mxu0 0.0
        %1161 = vmatpush1.msra.mxu0 %v1138
        %1162 = vmatprep.subr.mxu0 0.0
        %1163 = vmatpush1.msra.mxu0 %v1139
        %1164 = vmatprep.subr.mxu0 0.0
        %1165 = vmatpush1.msra.mxu0 %v1140
        %1166 = vmatprep.subr.mxu0 0.0
        %1167 = vmatpush1.msra.mxu0 %v1141
        %1168 = vmatprep.subr.mxu0 0.0
        %1169 = vmatpush1.msra.mxu0 %v1142
        %1170 = vmatprep.subr.mxu0 0.0
        %1171 = vmatpush1.msra.mxu0 %v1143
        %1172 = vmatprep.subr.mxu0 0.0
        %1173 = vmatpush1.msra.mxu0 %v1144
        %1174 = vmatprep.subr.mxu0 0.0
        %1175 = vmatpush1.msra.mxu0 %v1145
        %1176 = vmatprep.subr.mxu0 0.0
        %1177 = vmatpush1.msra.mxu0 %v1146
        %1178 = vmatprep.subr.mxu0 0.0
        %1179 = vmatpush1.msra.mxu0 %v1147
        %1180 = vmatprep.subr.mxu0 0.0
        %1181 = vmatpush1.msra.mxu0 0.0
        %1182 = vmatprep.subr.mxu0 0.0
        %1183 = vmatpush1.msra.mxu0 0.0
        %1184 = vmatprep.subr.mxu0 0.0
        %1185 = vmatpush1.msra.mxu0 0.0
        %1186 = vmatprep.subr.mxu0 0.0
        %1187 = vmatpush1.msra.mxu0 0.0
        %1188 = vmatprep.subr.mxu0 0.0
        %1189 = vmatpush1.msra.mxu0 0.0
        %1190 = vmatprep.subr.mxu0 0.0
        %1191 = vmatpush1.msra.mxu0 0.0
        %1192 = vmatprep.subr.mxu0 0.0
        %1193 = vmatpush1.msra.mxu0 0.0
        %1194 = vmatprep.subr.mxu0 0.0
        %1195 = vmatpush1.msra.mxu0 0.0
        %1196 = vmatprep.subr.mxu0 0.0
        %1197 = vmatpush1.msra.mxu0 0.0
        %1198 = vmatprep.subr.mxu0 0.0
        %1199 = vmatpush1.msra.mxu0 0.0
        %1200 = vmatprep.subr.mxu0 0.0
        %1201 = vmatpush1.msra.mxu0 0.0
        %1202 = vmatprep.subr.mxu0 0.0
        %1203 = vmatpush1.msra.mxu0 0.0
        %1204 = vmatprep.subr.mxu0 0.0
        %1205 = vmatpush1.msra.mxu0 0.0
        %1206 = vmatprep.subr.mxu0 0.0
        %1207 = vmatpush1.msra.mxu0 0.0
        %1208 = vmatprep.subr.mxu0 0.0
        %1209 = vmatpush1.msra.mxu0 0.0
        %1210 = vmatprep.subr.mxu0 0.0
        %1211 = vmatpush1.msra.mxu0 0.0
        %1212 = vmatprep.mubr.f32.mxu0 0.0
        %1213 = vmatmul.mubr.f32.gmra.mrb[0].mxu0 %v1129
        %v1214 = vpop.f32.mrb[0].mxu0
        %v1215 = vadd.f32 0.0, %v1214
        %v1216 = vpop.f32.mrb[0].mxu0
        %1217 = vmatprep.mubr.f32.mxu0 0.0
        %1218 = vmatmul.mubr.f32.gmra.mrb[0].mxu0 %v1131
        %v1219 = vpop.f32.mrb[0].mxu0
        %v1220 = vadd.f32 0.0, %v1219
        %v1221 = vpop.f32.mrb[0].mxu0
        %1222 = vdwg.mxu0
        %1223 = vmatprep.subr.mxu0 0.0
        %1224 = vmatpush1.msra.mxu0 %v1096
        %1225 = vmatprep.subr.mxu0 0.0
        %1226 = vmatpush1.msra.mxu0 %v1097
        %1227 = vmatprep.subr.mxu0 0.0
        %1228 = vmatpush1.msra.mxu0 %v1098
        %1229 = vmatprep.subr.mxu0 0.0
        %1230 = vmatpush1.msra.mxu0 %v1099
        %1231 = vmatprep.subr.mxu0 0.0
        %1232 = vmatpush1.msra.mxu0 %v1100
        %1233 = vmatprep.subr.mxu0 0.0
        %1234 = vmatpush1.msra.mxu0 %v1101
        %1235 = vmatprep.subr.mxu0 0.0
        %1236 = vmatpush1.msra.mxu0 %v1102
        %1237 = vmatprep.subr.mxu0 0.0
        %1238 = vmatpush1.msra.mxu0 %v1103
        %1239 = vmatprep.subr.mxu0 0.0
        %1240 = vmatpush1.msra.mxu0 %v1104
        %1241 = vmatprep.subr.mxu0 0.0
        %1242 = vmatpush1.msra.mxu0 %v1105
        %1243 = vmatprep.subr.mxu0 0.0
        %1244 = vmatpush1.msra.mxu0 %v1106
        %1245 = vmatprep.subr.mxu0 0.0
        %1246 = vmatpush1.msra.mxu0 %v1107
        %1247 = vmatprep.subr.mxu0 0.0
        %1248 = vmatpush1.msra.mxu0 %v1108
        %1249 = vmatprep.subr.mxu0 0.0
        %1250 = vmatpush1.msra.mxu0 %v1109
        %1251 = vmatprep.subr.mxu0 0.0
        %1252 = vmatpush1.msra.mxu0 %v1110
        %1253 = vmatprep.subr.mxu0 0.0
        %1254 = vmatpush1.msra.mxu0 %v1111
        %1255 = vmatprep.subr.mxu0 0.0
        %1256 = vmatpush1.msra.mxu0 %v1112
        %1257 = vmatprep.subr.mxu0 0.0
        %1258 = vmatpush1.msra.mxu0 %v1113
        %1259 = vmatprep.subr.mxu0 0.0
        %1260 = vmatpush1.msra.mxu0 %v1114
        %1261 = vmatprep.subr.mxu0 0.0
        %1262 = vmatpush1.msra.mxu0 %v1115
        %1263 = vmatprep.subr.mxu0 0.0
        %1264 = vmatpush1.msra.mxu0 %v1116
        %1265 = vmatprep.subr.mxu0 0.0
        %1266 = vmatpush1.msra.mxu0 %v1117
        %1267 = vmatprep.subr.mxu0 0.0
        %1268 = vmatpush1.msra.mxu0 %v1118
        %1269 = vmatprep.subr.mxu0 0.0
        %1270 = vmatpush1.msra.mxu0 %v1119
        %1271 = vmatprep.subr.mxu0 0.0
        %1272 = vmatpush1.msra.mxu0 %v1120
        %1273 = vmatprep.subr.mxu0 0.0
        %1274 = vmatpush1.msra.mxu0 %v1121
        %1275 = vmatprep.subr.mxu0 0.0
        %1276 = vmatpush1.msra.mxu0 %v1122
        %1277 = vmatprep.subr.mxu0 0.0
        %1278 = vmatpush1.msra.mxu0 %v1123
        %1279 = vmatprep.subr.mxu0 0.0
        %1280 = vmatpush1.msra.mxu0 %v1124
        %1281 = vmatprep.subr.mxu0 0.0
        %1282 = vmatpush1.msra.mxu0 %v1125
        %1283 = vmatprep.subr.mxu0 0.0
        %1284 = vmatpush1.msra.mxu0 %v1126
        %1285 = vmatprep.subr.mxu0 0.0
        %1286 = vmatpush1.msra.mxu0 %v1127
        %1287 = vmatprep.mubr.f32.mxu0 %v1093
        %1288 = vmatmul.mubr.f32.gmra.mrb[0].mxu0 %v1089
        %v1289 = vpop.f32.mrb[0].mxu0
        %v1290 = vadd.f32 %v1215, %v1289
        %v1291 = vpop.f32.mrb[0].mxu0
        %1292 = vmatprep.mubr.f32.mxu0 %v1095
        %1293 = vmatmul.mubr.f32.gmra.mrb[0].mxu0 %v1091
        %v1294 = vpop.f32.mrb[0].mxu0
        %v1295 = vadd.f32 %v1220, %v1294
        %v1296 = vpop.f32.mrb[0].mxu0
        %1297 = vdwg.mxu0
        %v1298 = vld [vmem:[%s11 + $0x2] sm:$0x1]
        %v1299 = vlaneseq
        %v1300 = vshrl.u32 %v1299, 7
        %v1301 = vsub.s32 0, %v1300
        %v1302 = vrot.slane %v1298, %v1301
        %v1303 = vadd.f32 %v1290, %v1302
        %v1304 = vadd.f32 %v1295, %v1302
        %v1305 = vsub.f32 0.0, %v1303
        %v1306 = vsub.f32 0.0, %v1304
        %v1307 = vmul.f32 %v1305, 1.442695
        %v1308 = vpow.pop %v1307
        %v1309 = vmul.f32 %v1306, 1.442695
        %v1310 = vpow.pop %v1309
        %v1311 = vadd.f32 %v1308, 1.0
        %v1312 = vadd.f32 %v1310, 1.0
        %v1313 = vrcp.pop %v1311
        %v1314 = vrcp.pop %v1312
        %v1315 = vmul.f32 %v1303, %v1313
        %v1316 = vmul.f32 %v1304, %v1314
        %1317 = vst [vmem:[#allocation4] sm:$0xff] %v1315
        %1318 = vst [vmem:[#allocation4 + $0x8] sm:$0x7f] %v1316
        %v1319 = vld [vmem:[#allocation4] ss:$2 sm:$0x7f]
        %s1320 = scalar_lea.vmem [#allocation4], 1
        %v1321 = vld [vmem:[%s1320] ss:$2 sm:$0x7f]
        %v1322 = vld [vmem:[%s7] sm:$0xff]
        %v1323 = vld [vmem:[%s7 + $0x8] sm:$0xff]
        %v1324 = vld [vmem:[%s7 + $0x10] sm:$0xff]
        %v1325 = vld [vmem:[%s7 + $0x18] sm:$0xff]
        %v1326 = vld [vmem:[%s7 + $0x20] sm:$0xff]
        %v1327 = vld [vmem:[%s7 + $0x28] sm:$0xff]
        %v1328 = vld [vmem:[%s7 + $0x30] sm:$0xff]
        %v1329 = vld [vmem:[%s7 + $0x38] sm:$0xff]
        %v1330 = vld [vmem:[%s7 + $0x40] sm:$0xff]
        %v1331 = vld [vmem:[%s7 + $0x48] sm:$0xff]
        %v1332 = vld [vmem:[%s7 + $0x50] sm:$0xff]
        %v1333 = vld [vmem:[%s7 + $0x58] sm:$0xff]
        %v1334 = vld [vmem:[%s7 + $0x60] sm:$0xff]
        %v1335 = vld [vmem:[%s7 + $0x68] sm:$0xff]
        %v1336 = vld [vmem:[%s7 + $0x70] sm:$0xff]
        %v1337 = vld [vmem:[%s7 + $0x78] sm:$0xff]
        %v1338 = vld [vmem:[%s7 + $0x80] sm:$0xff]
        %v1339 = vld [vmem:[%s7 + $0x88] sm:$0xff]
        %v1340 = vld [vmem:[%s7 + $0x90] sm:$0xff]
        %v1341 = vld [vmem:[%s7 + $0x98] sm:$0xff]
        %v1342 = vld [vmem:[%s7 + $0xa0] sm:$0xff]
        %v1343 = vld [vmem:[%s7 + $0xa8] sm:$0xff]
        %v1344 = vld [vmem:[%s7 + $0xb0] sm:$0xff]
        %v1345 = vld [vmem:[%s7 + $0xb8] sm:$0xff]
        %v1346 = vld [vmem:[%s7 + $0xc0] sm:$0xff]
        %v1347 = vld [vmem:[%s7 + $0xc8] sm:$0xff]
        %v1348 = vld [vmem:[%s7 + $0xd0] sm:$0xff]
        %v1349 = vld [vmem:[%s7 + $0xd8] sm:$0xff]
        %v1350 = vld [vmem:[%s7 + $0xe0] sm:$0xff]
        %v1351 = vld [vmem:[%s7 + $0xe8] sm:$0xff]
        %v1352 = vld [vmem:[%s7 + $0xf0] sm:$0xff]
        %v1353 = vld [vmem:[%s7 + $0xf8] sm:$0xff]
        %s1354 = scalar_lea.vmem [#allocation4], 2
        %v1355 = vld [vmem:[%s1354] ss:$2 sm:$0x7f]
        %v1356 = vld [vmem:[#allocation13] sm:$0xff]
        %v1357 = vld [vmem:[#allocation13 + $0x8] sm:$0xff]
        %v1358 = vld [vmem:[#allocation13 + $0x10] sm:$0xff]
        %v1359 = vld [vmem:[#allocation13 + $0x18] sm:$0xff]
        %v1360 = vld [vmem:[#allocation13 + $0x20] sm:$0xff]
        %v1361 = vld [vmem:[#allocation13 + $0x28] sm:$0xff]
        %v1362 = vld [vmem:[#allocation13 + $0x30] sm:$0xff]
        %v1363 = vld [vmem:[#allocation13 + $0x38] sm:$0xff]
        %v1364 = vld [vmem:[#allocation13 + $0x40] sm:$0xff]
        %v1365 = vld [vmem:[#allocation13 + $0x48] sm:$0xff]
        %v1366 = vld [vmem:[#allocation13 + $0x50] sm:$0xff]
        %v1367 = vld [vmem:[#allocation13 + $0x58] sm:$0xff]
        %v1368 = vld [vmem:[#allocation13 + $0x60] sm:$0xff]
        %v1369 = vld [vmem:[#allocation13 + $0x68] sm:$0xff]
        %v1370 = vld [vmem:[#allocation13 + $0x70] sm:$0xff]
        %v1371 = vld [vmem:[#allocation13 + $0x78] sm:$0xff]
        %1372 = vmatprep.subr.mxu0 0.0
        %1373 = vmatpush1.msra.mxu0 %v1356
        %1374 = vmatprep.subr.mxu0 0.0
        %1375 = vmatpush1.msra.mxu0 %v1357
        %1376 = vmatprep.subr.mxu0 0.0
        %1377 = vmatpush1.msra.mxu0 %v1358
        %1378 = vmatprep.subr.mxu0 0.0
        %1379 = vmatpush1.msra.mxu0 %v1359
        %1380 = vmatprep.subr.mxu0 0.0
        %1381 = vmatpush1.msra.mxu0 %v1360
        %1382 = vmatprep.subr.mxu0 0.0
        %1383 = vmatpush1.msra.mxu0 %v1361
        %1384 = vmatprep.subr.mxu0 0.0
        %1385 = vmatpush1.msra.mxu0 %v1362
        %1386 = vmatprep.subr.mxu0 0.0
        %1387 = vmatpush1.msra.mxu0 %v1363
        %1388 = vmatprep.subr.mxu0 0.0
        %1389 = vmatpush1.msra.mxu0 %v1364
        %1390 = vmatprep.subr.mxu0 0.0
        %1391 = vmatpush1.msra.mxu0 %v1365
        %1392 = vmatprep.subr.mxu0 0.0
        %1393 = vmatpush1.msra.mxu0 %v1366
        %1394 = vmatprep.subr.mxu0 0.0
        %1395 = vmatpush1.msra.mxu0 %v1367
        %1396 = vmatprep.subr.mxu0 0.0
        %1397 = vmatpush1.msra.mxu0 %v1368
        %1398 = vmatprep.subr.mxu0 0.0
        %1399 = vmatpush1.msra.mxu0 %v1369
        %1400 = vmatprep.subr.mxu0 0.0
        %1401 = vmatpush1.msra.mxu0 %v1370
        %1402 = vmatprep.subr.mxu0 0.0
        %1403 = vmatpush1.msra.mxu0 %v1371
        %1404 = vmatprep.subr.mxu0 0.0
        %1405 = vmatpush1.msra.mxu0 0.0
        %1406 = vmatprep.subr.mxu0 0.0
        %1407 = vmatpush1.msra.mxu0 0.0
        %1408 = vmatprep.subr.mxu0 0.0
        %1409 = vmatpush1.msra.mxu0 0.0
        %1410 = vmatprep.subr.mxu0 0.0
        %1411 = vmatpush1.msra.mxu0 0.0
        %1412 = vmatprep.subr.mxu0 0.0
        %1413 = vmatpush1.msra.mxu0 0.0
        %1414 = vmatprep.subr.mxu0 0.0
        %1415 = vmatpush1.msra.mxu0 0.0
        %1416 = vmatprep.subr.mxu0 0.0
        %1417 = vmatpush1.msra.mxu0 0.0
        %1418 = vmatprep.subr.mxu0 0.0
        %1419 = vmatpush1.msra.mxu0 0.0
        %1420 = vmatprep.subr.mxu0 0.0
        %1421 = vmatpush1.msra.mxu0 0.0
        %1422 = vmatprep.subr.mxu0 0.0
        %1423 = vmatpush1.msra.mxu0 0.0
        %1424 = vmatprep.subr.mxu0 0.0
        %1425 = vmatpush1.msra.mxu0 0.0
        %1426 = vmatprep.subr.mxu0 0.0
        %1427 = vmatpush1.msra.mxu0 0.0
        %1428 = vmatprep.subr.mxu0 0.0
        %1429 = vmatpush1.msra.mxu0 0.0
        %1430 = vmatprep.subr.mxu0 0.0
        %1431 = vmatpush1.msra.mxu0 0.0
        %1432 = vmatprep.subr.mxu0 0.0
        %1433 = vmatpush1.msra.mxu0 0.0
        %1434 = vmatprep.subr.mxu0 0.0
        %1435 = vmatpush1.msra.mxu0 0.0
        %1436 = vmatprep.mubr.f32.mxu0 0.0
        %1437 = vmatmul.mubr.f32.gmra.mrb[0].mxu0 %v1355
        %v1438 = vpop.f32.mrb[0].mxu0
        %v1439 = vadd.f32 0.0, %v1438
        %v1440 = vpop.f32.mrb[0].mxu0
        %1441 = vdwg.mxu0
        %1442 = vmatprep.subr.mxu0 0.0
        %1443 = vmatpush1.msra.mxu0 %v1322
        %1444 = vmatprep.subr.mxu0 0.0
        %1445 = vmatpush1.msra.mxu0 %v1323
        %1446 = vmatprep.subr.mxu0 0.0
        %1447 = vmatpush1.msra.mxu0 %v1324
        %1448 = vmatprep.subr.mxu0 0.0
        %1449 = vmatpush1.msra.mxu0 %v1325
        %1450 = vmatprep.subr.mxu0 0.0
        %1451 = vmatpush1.msra.mxu0 %v1326
        %1452 = vmatprep.subr.mxu0 0.0
        %1453 = vmatpush1.msra.mxu0 %v1327
        %1454 = vmatprep.subr.mxu0 0.0
        %1455 = vmatpush1.msra.mxu0 %v1328
        %1456 = vmatprep.subr.mxu0 0.0
        %1457 = vmatpush1.msra.mxu0 %v1329
        %1458 = vmatprep.subr.mxu0 0.0
        %1459 = vmatpush1.msra.mxu0 %v1330
        %1460 = vmatprep.subr.mxu0 0.0
        %1461 = vmatpush1.msra.mxu0 %v1331
        %1462 = vmatprep.subr.mxu0 0.0
        %1463 = vmatpush1.msra.mxu0 %v1332
        %1464 = vmatprep.subr.mxu0 0.0
        %1465 = vmatpush1.msra.mxu0 %v1333
        %1466 = vmatprep.subr.mxu0 0.0
        %1467 = vmatpush1.msra.mxu0 %v1334
        %1468 = vmatprep.subr.mxu0 0.0
        %1469 = vmatpush1.msra.mxu0 %v1335
        %1470 = vmatprep.subr.mxu0 0.0
        %1471 = vmatpush1.msra.mxu0 %v1336
        %1472 = vmatprep.subr.mxu0 0.0
        %1473 = vmatpush1.msra.mxu0 %v1337
        %1474 = vmatprep.subr.mxu0 0.0
        %1475 = vmatpush1.msra.mxu0 %v1338
        %1476 = vmatprep.subr.mxu0 0.0
        %1477 = vmatpush1.msra.mxu0 %v1339
        %1478 = vmatprep.subr.mxu0 0.0
        %1479 = vmatpush1.msra.mxu0 %v1340
        %1480 = vmatprep.subr.mxu0 0.0
        %1481 = vmatpush1.msra.mxu0 %v1341
        %1482 = vmatprep.subr.mxu0 0.0
        %1483 = vmatpush1.msra.mxu0 %v1342
        %1484 = vmatprep.subr.mxu0 0.0
        %1485 = vmatpush1.msra.mxu0 %v1343
        %1486 = vmatprep.subr.mxu0 0.0
        %1487 = vmatpush1.msra.mxu0 %v1344
        %1488 = vmatprep.subr.mxu0 0.0
        %1489 = vmatpush1.msra.mxu0 %v1345
        %1490 = vmatprep.subr.mxu0 0.0
        %1491 = vmatpush1.msra.mxu0 %v1346
        %1492 = vmatprep.subr.mxu0 0.0
        %1493 = vmatpush1.msra.mxu0 %v1347
        %1494 = vmatprep.subr.mxu0 0.0
        %1495 = vmatpush1.msra.mxu0 %v1348
        %1496 = vmatprep.subr.mxu0 0.0
        %1497 = vmatpush1.msra.mxu0 %v1349
        %1498 = vmatprep.subr.mxu0 0.0
        %1499 = vmatpush1.msra.mxu0 %v1350
        %1500 = vmatprep.subr.mxu0 0.0
        %1501 = vmatpush1.msra.mxu0 %v1351
        %1502 = vmatprep.subr.mxu0 0.0
        %1503 = vmatpush1.msra.mxu0 %v1352
        %1504 = vmatprep.subr.mxu0 0.0
        %1505 = vmatpush1.msra.mxu0 %v1353
        %1506 = vmatprep.mubr.f32.mxu0 %v1321
        %1507 = vmatmul.mubr.f32.gmra.mrb[0].mxu0 %v1319
        %v1508 = vpop.f32.mrb[0].mxu0
        %v1509 = vadd.f32 %v1439, %v1508
        %v1510 = vpop.f32.mrb[0].mxu0
        %1511 = vdwg.mxu0
        %v1512 = vld [vmem:[%s11 + $0x3] sm:$0x1]
        %v1513 = vlaneseq
        %v1514 = vshrl.u32 %v1513, 7
        %v1515 = vsub.s32 0, %v1514
        %v1516 = vrot.slane %v1512, %v1515
        %v1517 = vadd.f32 %v1509, %v1516
        %v1518 = vsub.f32 0.0, %v1517
        %v1519 = vmul.f32 %v1518, 1.442695
        %v1520 = vpow.pop %v1519
        %v1521 = vadd.f32 %v1520, 1.0
        %v1522 = vrcp.pop %v1521
        %v1523 = vmul.f32 %v1517, %v1522
        %1524 = vst [vmem:[#allocation5] sm:$0x7f] %v1523
        %v1525 = vld [vmem:[#allocation5] ss:$2 sm:$0x7]
        %s1526 = scalar_lea.vmem [#allocation5], 1
        %v1527 = vld [vmem:[%s1526] ss:$2 sm:$0x7]
        %v1528 = vld [vmem:[%s9] sm:$0xff]
        %v1529 = vld [vmem:[%s9 + $0x8] sm:$0xff]
        %v1530 = vld [vmem:[%s9 + $0x10] sm:$0xff]
        %v1531 = vld [vmem:[%s9 + $0x18] sm:$0xff]
        %v1532 = vld [vmem:[%s9 + $0x20] sm:$0xff]
        %v1533 = vld [vmem:[%s9 + $0x28] sm:$0xff]
        %v1534 = vld [vmem:[%s9 + $0x30] sm:$0xff]
        %v1535 = vld [vmem:[%s9 + $0x38] sm:$0xff]
        %v1536 = vld [vmem:[%s9 + $0x40] sm:$0xff]
        %v1537 = vld [vmem:[%s9 + $0x48] sm:$0xff]
        %v1538 = vld [vmem:[%s9 + $0x50] sm:$0xff]
        %v1539 = vld [vmem:[%s9 + $0x58] sm:$0xff]
        %v1540 = vld [vmem:[%s9 + $0x60] sm:$0xff]
        %v1541 = vld [vmem:[%s9 + $0x68] sm:$0xff]
        %v1542 = vld [vmem:[%s9 + $0x70] sm:$0xff]
        %v1543 = vld [vmem:[%s9 + $0x78] sm:$0xff]
        %v1544 = vld [vmem:[%s9 + $0x80] sm:$0xff]
        %v1545 = vld [vmem:[%s9 + $0x88] sm:$0xff]
        %v1546 = vld [vmem:[%s9 + $0x90] sm:$0xff]
        %v1547 = vld [vmem:[%s9 + $0x98] sm:$0xff]
        %v1548 = vld [vmem:[%s9 + $0xa0] sm:$0xff]
        %v1549 = vld [vmem:[%s9 + $0xa8] sm:$0xff]
        %v1550 = vld [vmem:[%s9 + $0xb0] sm:$0xff]
        %v1551 = vld [vmem:[%s9 + $0xb8] sm:$0xff]
        %v1552 = vld [vmem:[%s9 + $0xc0] sm:$0xff]
        %v1553 = vld [vmem:[%s9 + $0xc8] sm:$0xff]
        %v1554 = vld [vmem:[%s9 + $0xd0] sm:$0xff]
        %v1555 = vld [vmem:[%s9 + $0xd8] sm:$0xff]
        %v1556 = vld [vmem:[%s9 + $0xe0] sm:$0xff]
        %v1557 = vld [vmem:[%s9 + $0xe8] sm:$0xff]
        %v1558 = vld [vmem:[%s9 + $0xf0] sm:$0xff]
        %v1559 = vld [vmem:[%s9 + $0xf8] sm:$0xff]
        %s1560 = scalar_lea.vmem [#allocation5], 2
        %v1561 = vld [vmem:[%s1560] ss:$2 sm:$0x7]
        %v1562 = vld [vmem:[#allocation14] sm:$0xff]
        %v1563 = vld [vmem:[#allocation14 + $0x8] sm:$0xff]
        %v1564 = vld [vmem:[#allocation14 + $0x10] sm:$0xff]
        %v1565 = vld [vmem:[#allocation14 + $0x18] sm:$0xff]
        %v1566 = vld [vmem:[#allocation14 + $0x20] sm:$0xff]
        %v1567 = vld [vmem:[#allocation14 + $0x28] sm:$0xff]
        %v1568 = vld [vmem:[#allocation14 + $0x30] sm:$0xff]
        %v1569 = vld [vmem:[#allocation14 + $0x38] sm:$0xff]
        %v1570 = vld [vmem:[#allocation14 + $0x40] sm:$0xff]
        %v1571 = vld [vmem:[#allocation14 + $0x48] sm:$0xff]
        %v1572 = vld [vmem:[#allocation14 + $0x50] sm:$0xff]
        %v1573 = vld [vmem:[#allocation14 + $0x58] sm:$0xff]
        %v1574 = vld [vmem:[#allocation14 + $0x60] sm:$0xff]
        %v1575 = vld [vmem:[#allocation14 + $0x68] sm:$0xff]
        %v1576 = vld [vmem:[#allocation14 + $0x70] sm:$0xff]
        %v1577 = vld [vmem:[#allocation14 + $0x78] sm:$0xff]
        %1578 = vmatprep.subr.mxu0 0.0
        %1579 = vmatpush1.msra.mxu0 %v1562
        %1580 = vmatprep.subr.mxu0 0.0
        %1581 = vmatpush1.msra.mxu0 %v1563
        %1582 = vmatprep.subr.mxu0 0.0
        %1583 = vmatpush1.msra.mxu0 %v1564
        %1584 = vmatprep.subr.mxu0 0.0
        %1585 = vmatpush1.msra.mxu0 %v1565
        %1586 = vmatprep.subr.mxu0 0.0
        %1587 = vmatpush1.msra.mxu0 %v1566
        %1588 = vmatprep.subr.mxu0 0.0
        %1589 = vmatpush1.msra.mxu0 %v1567
        %1590 = vmatprep.subr.mxu0 0.0
        %1591 = vmatpush1.msra.mxu0 %v1568
        %1592 = vmatprep.subr.mxu0 0.0
        %1593 = vmatpush1.msra.mxu0 %v1569
        %1594 = vmatprep.subr.mxu0 0.0
        %1595 = vmatpush1.msra.mxu0 %v1570
        %1596 = vmatprep.subr.mxu0 0.0
        %1597 = vmatpush1.msra.mxu0 %v1571
        %1598 = vmatprep.subr.mxu0 0.0
        %1599 = vmatpush1.msra.mxu0 %v1572
        %1600 = vmatprep.subr.mxu0 0.0
        %1601 = vmatpush1.msra.mxu0 %v1573
        %1602 = vmatprep.subr.mxu0 0.0
        %1603 = vmatpush1.msra.mxu0 %v1574
        %1604 = vmatprep.subr.mxu0 0.0
        %1605 = vmatpush1.msra.mxu0 %v1575
        %1606 = vmatprep.subr.mxu0 0.0
        %1607 = vmatpush1.msra.mxu0 %v1576
        %1608 = vmatprep.subr.mxu0 0.0
        %1609 = vmatpush1.msra.mxu0 %v1577
        %1610 = vmatprep.subr.mxu0 0.0
        %1611 = vmatpush1.msra.mxu0 0.0
        %1612 = vmatprep.subr.mxu0 0.0
        %1613 = vmatpush1.msra.mxu0 0.0
        %1614 = vmatprep.subr.mxu0 0.0
        %1615 = vmatpush1.msra.mxu0 0.0
        %1616 = vmatprep.subr.mxu0 0.0
        %1617 = vmatpush1.msra.mxu0 0.0
        %1618 = vmatprep.subr.mxu0 0.0
        %1619 = vmatpush1.msra.mxu0 0.0
        %1620 = vmatprep.subr.mxu0 0.0
        %1621 = vmatpush1.msra.mxu0 0.0
        %1622 = vmatprep.subr.mxu0 0.0
        %1623 = vmatpush1.msra.mxu0 0.0
        %1624 = vmatprep.subr.mxu0 0.0
        %1625 = vmatpush1.msra.mxu0 0.0
        %1626 = vmatprep.subr.mxu0 0.0
        %1627 = vmatpush1.msra.mxu0 0.0
        %1628 = vmatprep.subr.mxu0 0.0
        %1629 = vmatpush1.msra.mxu0 0.0
        %1630 = vmatprep.subr.mxu0 0.0
        %1631 = vmatpush1.msra.mxu0 0.0
        %1632 = vmatprep.subr.mxu0 0.0
        %1633 = vmatpush1.msra.mxu0 0.0
        %1634 = vmatprep.subr.mxu0 0.0
        %1635 = vmatpush1.msra.mxu0 0.0
        %1636 = vmatprep.subr.mxu0 0.0
        %1637 = vmatpush1.msra.mxu0 0.0
        %1638 = vmatprep.subr.mxu0 0.0
        %1639 = vmatpush1.msra.mxu0 0.0
        %1640 = vmatprep.subr.mxu0 0.0
        %1641 = vmatpush1.msra.mxu0 0.0
        %1642 = vmatprep.mubr.f32.mxu0 0.0
        %1643 = vmatmul.mubr.f32.gmra.mrb[0].mxu0 %v1561
        %v1644 = vpop.f32.mrb[0].mxu0
        %v1645 = vadd.f32 0.0, %v1644
        %v1646 = vpop.f32.mrb[0].mxu0
        %1647 = vdwg.mxu0
        %1648 = vmatprep.subr.mxu0 0.0
        %1649 = vmatpush1.msra.mxu0 %v1528
        %1650 = vmatprep.subr.mxu0 0.0
        %1651 = vmatpush1.msra.mxu0 %v1529
        %1652 = vmatprep.subr.mxu0 0.0
        %1653 = vmatpush1.msra.mxu0 %v1530
        %1654 = vmatprep.subr.mxu0 0.0
        %1655 = vmatpush1.msra.mxu0 %v1531
        %1656 = vmatprep.subr.mxu0 0.0
        %1657 = vmatpush1.msra.mxu0 %v1532
        %1658 = vmatprep.subr.mxu0 0.0
        %1659 = vmatpush1.msra.mxu0 %v1533
        %1660 = vmatprep.subr.mxu0 0.0
        %1661 = vmatpush1.msra.mxu0 %v1534
        %1662 = vmatprep.subr.mxu0 0.0
        %1663 = vmatpush1.msra.mxu0 %v1535
        %1664 = vmatprep.subr.mxu0 0.0
        %1665 = vmatpush1.msra.mxu0 %v1536
        %1666 = vmatprep.subr.mxu0 0.0
        %1667 = vmatpush1.msra.mxu0 %v1537
        %1668 = vmatprep.subr.mxu0 0.0
        %1669 = vmatpush1.msra.mxu0 %v1538
        %1670 = vmatprep.subr.mxu0 0.0
        %1671 = vmatpush1.msra.mxu0 %v1539
        %1672 = vmatprep.subr.mxu0 0.0
        %1673 = vmatpush1.msra.mxu0 %v1540
        %1674 = vmatprep.subr.mxu0 0.0
        %1675 = vmatpush1.msra.mxu0 %v1541
        %1676 = vmatprep.subr.mxu0 0.0
        %1677 = vmatpush1.msra.mxu0 %v1542
        %1678 = vmatprep.subr.mxu0 0.0
        %1679 = vmatpush1.msra.mxu0 %v1543
        %1680 = vmatprep.subr.mxu0 0.0
        %1681 = vmatpush1.msra.mxu0 %v1544
        %1682 = vmatprep.subr.mxu0 0.0
        %1683 = vmatpush1.msra.mxu0 %v1545
        %1684 = vmatprep.subr.mxu0 0.0
        %1685 = vmatpush1.msra.mxu0 %v1546
        %1686 = vmatprep.subr.mxu0 0.0
        %1687 = vmatpush1.msra.mxu0 %v1547
        %1688 = vmatprep.subr.mxu0 0.0
        %1689 = vmatpush1.msra.mxu0 %v1548
        %1690 = vmatprep.subr.mxu0 0.0
        %1691 = vmatpush1.msra.mxu0 %v1549
        %1692 = vmatprep.subr.mxu0 0.0
        %1693 = vmatpush1.msra.mxu0 %v1550
        %1694 = vmatprep.subr.mxu0 0.0
        %1695 = vmatpush1.msra.mxu0 %v1551
        %1696 = vmatprep.subr.mxu0 0.0
        %1697 = vmatpush1.msra.mxu0 %v1552
        %1698 = vmatprep.subr.mxu0 0.0
        %1699 = vmatpush1.msra.mxu0 %v1553
        %1700 = vmatprep.subr.mxu0 0.0
        %1701 = vmatpush1.msra.mxu0 %v1554
        %1702 = vmatprep.subr.mxu0 0.0
        %1703 = vmatpush1.msra.mxu0 %v1555
        %1704 = vmatprep.subr.mxu0 0.0
        %1705 = vmatpush1.msra.mxu0 %v1556
        %1706 = vmatprep.subr.mxu0 0.0
        %1707 = vmatpush1.msra.mxu0 %v1557
        %1708 = vmatprep.subr.mxu0 0.0
        %1709 = vmatpush1.msra.mxu0 %v1558
        %1710 = vmatprep.subr.mxu0 0.0
        %1711 = vmatpush1.msra.mxu0 %v1559
        %1712 = vmatprep.mubr.f32.mxu0 %v1527
        %1713 = vmatmul.mubr.f32.gmra.mrb[0].mxu0 %v1525
        %v1714 = vpop.f32.mrb[0].mxu0
        %v1715 = vadd.f32 %v1645, %v1714
        %v1716 = vpop.f32.mrb[0].mxu0
        %1717 = vdwg.mxu0
        %v1718 = vld [vmem:[%s11 + $0x4] sm:$0x1]
        %v1719 = vlaneseq
        %v1720 = vshrl.u32 %v1719, 7
        %v1721 = vsub.s32 0, %v1720
        %v1722 = vrot.slane %v1718, %v1721
        %v1723 = vadd.f32 %v1715, %v1722
        %1724 = vst [vmem:[%s499] sm:$0x7] %v1723
        %p1725 = scmp.lt.s32.totalorder %s27, 1
        %s1726 = scalar_select %p1725, %s27, 1
        %s1727 = smul.addr %s1726, 4
        %s1728 = scalar_lea.vmem %s12, %s1727
        // Predicated region
        $region93: #{_lambda_.1} parent=67 // pred_check
          %p1729 = pneg %p302
        $region94: #{_lambda_.1} parent=67 // pred_check_branch
          %1731 = sbr.rel (%p1729) target = $region96
        $region95: #{_lambda_.1} parent=67 // pred_region
          _
        $region96: #{_lambda_.1} parent=67 // pred_fallthru
          _
      $region68: #{_lambda_.1} parent=5 // pred_fallthru
        _
      %p1732 = scmp.le.s32.totalorder 2, %s22
      // Predicated region
      $region97: #{_lambda_.1} parent=5 // pred_check
        %p1733 = pneg %p1732
      $region98: #{_lambda_.1} parent=5 // pred_check_branch
        %1735 = sbr.rel (%p1733) target = $region100
      $region99: #{_lambda_.1} parent=5 // pred_region
        %s1736 = ssub.s32 %s22, 2
        // Predicated region
        $region101: #{_lambda_.1} parent=99 // pred_check
          %p1737 = pneg %p308
        $region102: #{_lambda_.1} parent=99 // pred_check_branch
          %1739 = sbr.rel (%p1737) target = $region104
        $region103: #{_lambda_.1} parent=99 // pred_region
          %p1740 = scmp.lt.s32.totalorder %s28, 1
          %s1741 = scalar_select %p1740, %s28, 1
          %s1742 = smul.addr %s1741, 4
          %s1743 = scalar_lea.vmem %s12, %s1742
        $region104: #{_lambda_.1} parent=99 // pred_fallthru
          _
      $region100: #{_lambda_.1} parent=5 // pred_fallthru
        _
    $region6: #{_lambda_.1} parent=1 // loop_footer
      %s26 = sadd.s32 1, %s22
    $region7: #{_lambda_.1} parent=1 // loop_footer_branch
      %21 = sbr.rel target = $region3
    $region8: #{_lambda_.1} parent=1 // loop_exit
      _
    %1744 = vsyncpa [#allocation7], 1
    %s1745 = scalar_lea.sflag [#allocation7], 1
    %1746 = vsyncpa %s1745, 1
    %1747 = vsyncpa [#allocation9], 1
    %1748 = vsyncpa [#allocation12], 1
    %1749 = vsyncpa [#allocation15], 1

</llo_original>
